<compile_context>
chip_gen: v7x
topology: tpu7x:2x2x1
jax: 0.10.0
libtpu: 0.0.40
codegen_flags: <defaults>
</compile_context>

<pallas_src>
import functools
import inspect
import math

import jax
import jax.numpy as jnp
from jax.experimental import pallas as pl
from jax.experimental.pallas import tpu as pltpu


def _layer_norm_f32(v, w, b, eps=1e-5):
    mu = jnp.mean(v, axis=-1, keepdims=True)
    var = jnp.mean((v - mu) ** 2, axis=-1, keepdims=True)
    return (v - mu) * jax.lax.rsqrt(var + eps) * w + b


def encoder_layer_kernel(
    x_ref,                      # (R, E)  R = block_n * T rows of packed sequences (f32)
    w_in_ref, b_in_ref,         # (E, 3E) bf16, (1, 3E) f32  (1/sqrt(Dh) folded into Q cols)
    w_out_ref, b_out_ref,       # (E, E)  bf16, (1, E)  f32
    w1_ref, b1_ref,             # (E, 4E) bf16, (1, 4E) f32
    w2_ref, b2_ref,             # (4E, E) bf16, (1, E)  f32
    n1w_ref, n1b_ref,           # (1, E) f32
    n2w_ref, n2b_ref,           # (1, E) f32
    o_ref,                      # (R, E)
    attn_ref,                   # VMEM scratch (R, E) f32: per-head outputs written in place
    *,
    num_heads: int,
    seq_len: int,
):
    x = x_ref[...].astype(jnp.float32)           # (R, E)
    R, E = x.shape
    head_dim = E // num_heads
    mm_dtype = w_in_ref.dtype                    # bf16 MXU operands, f32 accumulation

    # Block-diagonal additive bias generated in-kernel (VPU iota/compare only; no
    # (R,R) f32 HBM input / VMEM pipeline block).  seq_id = floor(row / T) computed
    # via float multiply + floor: rows are < ~1e3, so (r + 0.5) * (1/T) is at least
    # 0.5/T away from any integer boundary -- far above f32 rounding error, exact.
    inv_t = 1.0 / float(seq_len)
    row = jax.lax.broadcasted_iota(jnp.int32, (R, R), 0).astype(jnp.float32)
    col = jax.lax.broadcasted_iota(jnp.int32, (R, R), 1).astype(jnp.float32)
    same_seq = jnp.floor((row + 0.5) * inv_t) == jnp.floor((col + 0.5) * inv_t)
    attn_bias = jnp.where(same_seq, jnp.float32(0.0), jnp.float32(-1e30))   # (R, R)

    # ---- self-attention block (pre-norm) ------------------------------------
    xn = _layer_norm_f32(x, n1w_ref[...], n1b_ref[...])
    qkv = jnp.dot(xn.astype(mm_dtype), w_in_ref[...],
                  preferred_element_type=jnp.float32) + b_in_ref[...]       # (R, 3E)

    for h in range(num_heads):                   # static loop over heads
        lo = h * head_dim
        qh = qkv[:, lo:lo + head_dim].astype(mm_dtype)
        kh = qkv[:, E + lo:E + lo + head_dim].astype(mm_dtype)
        vh = qkv[:, 2 * E + lo:2 * E + lo + head_dim].astype(mm_dtype)
        # One (R, Dh) x (R, Dh)^T score matmul over the whole packed row-slab;
        # contraction on the last dim of both operands (no materialized k.T).
        # The block-diagonal bias keeps attention strictly within each sequence.
        s = jax.lax.dot_general(qh, kh, (((1,), (1,)), ((), ())),
                                preferred_element_type=jnp.float32)         # (R, R)
        s = s + attn_bias
        s = s - jnp.max(s, axis=-1, keepdims=True)
        p = jnp.exp(s)
        # approx reciprocal runs on the EUP slot; rows sum to 1 only to ~1e-3 rel
        # error, which is fine for inference at the stated tolerance.
        p = p * pl.reciprocal(jnp.sum(p, axis=-1, keepdims=True), approx=True)
        # Write this head's output straight into the (R, E) scratch: no H-way lane
        # concatenate, and no H live (R, Dh) f32 partials through the loop.
        attn_ref[:, lo:lo + head_dim] = jnp.dot(p.astype(mm_dtype), vh,
                                                preferred_element_type=jnp.float32)

    attn = jnp.dot(attn_ref[...].astype(mm_dtype), w_out_ref[...],
                   preferred_element_type=jnp.float32) + b_out_ref[...]
    x = x + attn                                 # dropout1 = identity (eval)

    # ---- feed-forward block (pre-norm) ---------------------------------------
    xn2 = _layer_norm_f32(x, n2w_ref[...], n2b_ref[...])
    h1 = jnp.dot(xn2.astype(mm_dtype), w1_ref[...],
                 preferred_element_type=jnp.float32) + b1_ref[...]
    # relu_ then immediate cast so the (R, 4E) f32 intermediate dies early.
    h1 = jnp.maximum(h1, 0.0).astype(mm_dtype)   # inner dropout = identity (eval)
    ff = jnp.dot(h1, w2_ref[...], preferred_element_type=jnp.float32) + b2_ref[...]
    x = x + ff                                   # dropout2 = identity (eval)

    o_ref[...] = x.astype(o_ref.dtype)


def prepare_params(params, num_heads, compute_dtype=jnp.bfloat16):
    """Fold 1/sqrt(head_dim) into the Q projection columns and cast matmul weights
    to the MXU dtype.  Call ONCE and reuse the result across layer calls (re-casting
    12*E^2 weights per call is un-hidable HBM traffic outside the kernel)."""
    E = params["w_out_t"].shape[0]
    head_dim = E // num_heads
    scale = 1.0 / math.sqrt(head_dim)
    col = jnp.arange(3 * E)
    col_scale = jnp.where(col < E, scale, 1.0).astype(jnp.float32)
    w_in = params["w_in_t"].astype(jnp.float32) * col_scale[None, :]
    b_in = params["b_in"].astype(jnp.float32) * col_scale[None, :]
    return (
        w_in.astype(compute_dtype), b_in,
        params["w_out_t"].astype(compute_dtype), params["b_out"].astype(jnp.float32),
        params["w1_t"].astype(compute_dtype), params["b1"].astype(jnp.float32),
        params["w2_t"].astype(compute_dtype), params["b2"].astype(jnp.float32),
        params["n1_w"].astype(jnp.float32), params["n1_b"].astype(jnp.float32),
        params["n2_w"].astype(jnp.float32), params["n2_b"].astype(jnp.float32),
    )


def _chip_info():
    """Best-effort chip heuristics (generation + VMEM capacity). Config only."""
    kind = ""
    try:
        kind = jax.devices()[0].device_kind.lower()
    except Exception:
        pass
    is_v5e = ("v5 lite" in kind) or ("v5e" in kind) or ("v5litepod" in kind)
    is_v7 = ("v7" in kind) or ("tpu7" in kind) or ("tpu 7" in kind)
    try:
        vmem_cap = int(pltpu.get_tpu_info().vmem_capacity_bytes)
    except Exception:
        vmem_cap = 64 << 20            # assume the smallest (v7x-sized) part
    return is_v5e, is_v7, vmem_cap


def _supports_single_buffered_weights():
    """Capability check (not a silent compile-time fallback) for pipeline_mode."""
    if not hasattr(pl, "Buffered"):
        return False
    try:
        return "pipeline_mode" in inspect.signature(pl.BlockSpec).parameters
    except (TypeError, ValueError):
        return False


def temporal_encoder_layer_batch_major(x, params, num_heads, *,
                                       block_n=None, compute_dtype=jnp.bfloat16):
    """x: (N, T, E) batch-major f32.  Returns (N, T, E).

    `params` is either the raw parameter dict (prepared on every call - slow) or
    the tuple returned by prepare_params() (preferred: prepare once, reuse)."""
    if isinstance(params, dict):
        params = prepare_params(params, num_heads, compute_dtype)
    weights = params

    N, T, E = x.shape
    is_v5e, is_v7, vmem_cap = _chip_info()

    # ---- pack several sequences into each grid step ---------------------------
    # Target R = block_n*T rows per step: 128 on v5e (128-wide MXU), 256 on
    # v6e/v7x, capped at ~E so the masked O(R^2) score/exp waste of the
    # block-diagonal attention stays small vs. the 24*R*E^2 projection/FFN FLOPs.
    if block_n is None:
        row_target = 128 if is_v5e else 256
        row_target = min(row_target, max(E, T))
        block_n = max(1, row_target // T)
    block_n = max(1, min(block_n, N))
    g = 8 // math.gcd(T, 8)               # keep R = block_n*T a multiple of 8 (f32 sublane tile)
    block_n = -(-block_n // g) * g
    n_blocks = -(-N // block_n)
    if is_v7 and n_blocks < 2 and block_n > g and N > 1:
        # v7x has two TensorCores: make the "parallel" grid axis at least 2 long.
        block_n = max(g, (-(-(block_n // 2) // g)) * g)
        n_blocks = -(-N // block_n)
    N_pad = n_blocks * block_n
    if N_pad != N:
        # Padded rows are all-zero; layernorm over them is finite (var=0 -> rsqrt(eps))
        # and their outputs are dropped by [:N] below.  Intentional -- do not "fix".
        x = jnp.pad(x, ((0, N_pad - N), (0, 0), (0, 0)))

    R = block_n * T
    x_flat = x.reshape(N_pad * T, E)       # sequence b occupies rows [b*T, (b+1)*T)

    kernel = functools.partial(encoder_layer_kernel, num_heads=num_heads, seq_len=T)
    single_buffer = _supports_single_buffered_weights()

    def _weight_spec(shape):
        idx = lambda i: (0,) * len(shape)
        if single_buffer:
            # Constant-index weight blocks never change across the grid: single-
            # buffer them so each is resident exactly once in VMEM (matters on v7x).
            return pl.BlockSpec(shape, idx, pipeline_mode=pl.Buffered(1))
        return pl.BlockSpec(shape, idx)

    in_specs = [pl.BlockSpec((R, E), lambda i: (i, 0))]
    in_specs += [_weight_spec(w.shape) for w in weights]
    out_spec = pl.BlockSpec((R, E), lambda i: (i, 0))
    out_shape = jax.ShapeDtypeStruct((N_pad * T, E), x.dtype)

    # ---- VMEM budget: what we need, capped at 3/4 of physical VMEM ------------
    # (48 MiB on a 64 MiB v7x part, 96 MiB on 128 MiB v5e/v6e parts).
    weight_bytes = sum(int(w.size) * w.dtype.itemsize for w in weights)
    io_block_bytes = R * E * x.dtype.itemsize
    work_bytes = 4 * (R * 12 * E + R * 16 * E + R * E + 3 * R * R)
    need = ((1 if single_buffer else 2) * weight_bytes
            + 4 * io_block_bytes + work_bytes + (8 << 20))
    vmem_limit = int(min((vmem_cap * 3) // 4, max(need, 32 << 20)))

    # ---- advisory cost estimate for XLA's scheduler ----------------------------
    head_dim = E // num_heads
    flops_per_block = (2 * R * E * 3 * E + 2 * R * E * E + 2 * R * E * 4 * E
                       + 2 * R * 4 * E * E + num_heads * 4 * R * R * head_dim)
    cost = pl.CostEstimate(
        flops=int(n_blocks * flops_per_block),
        transcendentals=int(n_blocks * num_heads * R * R),
        bytes_accessed=int(2 * N_pad * T * E * x.dtype.itemsize + weight_bytes),
    )

    out = pl.pallas_call(
        kernel,
        out_shape=out_shape,
        grid=(n_blocks,),
        in_specs=in_specs,
        out_specs=out_spec,
        scratch_shapes=[pltpu.VMEM((R, E), jnp.float32)],
        compiler_params=pltpu.CompilerParams(
            dimension_semantics=("parallel",),
            vmem_limit_bytes=vmem_limit,
        ),
        cost_estimate=cost,
    )(x_flat, *weights)

    return out.reshape(N_pad, T, E)[:N]


def temporal_encoder_layer(src, params, num_heads, **kwargs):
    """src: (T, N, E) seq-first, like PyTorch. attn_mask / key_padding_mask = None.

    The boundary transposes are layout plumbing only; callers already holding
    (N, T, E) batch-major data should call temporal_encoder_layer_batch_major
    directly and avoid the extra HBM pass."""
    x = jnp.transpose(src, (1, 0, 2))              # (N, T, E)
    out = temporal_encoder_layer_batch_major(x, params, num_heads, **kwargs)
    return jnp.transpose(out, (1, 0, 2))           # back to (T, N, E)


def init_params(key, embed_dim):
    """Deterministic synthetic parameters matching the PyTorch module's shapes."""
    E = embed_dim
    ks = jax.random.split(key, 8)
    s = 0.05
    # PyTorch stores in_proj_weight as (3E, E); we keep the transposed (E, 3E).
    w_in = jax.random.normal(ks[0], (3 * E, E), jnp.float32) * s
    w_out = jax.random.normal(ks[1], (E, E), jnp.float32) * s
    w1 = jax.random.normal(ks[2], (4 * E, E), jnp.float32) * s
    w2 = jax.random.normal(ks[3], (E, 4 * E), jnp.float32) * s
    return {
        "w_in_t": w_in.T,                                      # (E, 3E)
        "b_in": (jax.random.normal(ks[4], (3 * E,)) * s).reshape(1, 3 * E),
        "w_out_t": w_out.T,                                    # (E, E)
        "b_out": (jax.random.normal(ks[5], (E,)) * s).reshape(1, E),
        "w1_t": w1.T,                                          # (E, 4E)
        "b1": (jax.random.normal(ks[6], (4 * E,)) * s).reshape(1, 4 * E),
        "w2_t": w2.T,                                          # (4E, E)
        "b2": (jax.random.normal(ks[7], (E,)) * s).reshape(1, E),
        "n1_w": jnp.ones((1, E), jnp.float32),
        "n1_b": jnp.zeros((1, E), jnp.float32),
        "n2_w": jnp.ones((1, E), jnp.float32),
        "n2_b": jnp.zeros((1, E), jnp.float32),
    }


def _reference(src, params, num_heads):
    """Pure-JAX f32 reference of the PyTorch forward (eval mode, no masks)."""
    T, N, E = src.shape
    Dh = E // num_heads

    def ln(v, w, b):
        mu = jnp.mean(v, -1, keepdims=True)
        var = jnp.mean((v - mu) ** 2, -1, keepdims=True)
        return (v - mu) / jnp.sqrt(var + 1e-5) * w[0] + b[0]

    x = src
    xn = ln(x, params["n1_w"], params["n1_b"])
    qkv = xn @ params["w_in_t"] + params["b_in"][0]            # (T, N, 3E)
    q, k, v = qkv[..., :E], qkv[..., E:2 * E], qkv[..., 2 * E:]

    def split(t):  # (T, N, E) -> (N*H, T, Dh)
        return jnp.transpose(t.reshape(T, N * num_heads, Dh), (1, 0, 2))

    qh, kh, vh = split(q), split(k), split(v)
    s = jnp.einsum("btd,bsd->bts", qh, kh) / jnp.sqrt(Dh)
    p = jax.nn.softmax(s, axis=-1)
    o = jnp.einsum("bts,bsd->btd", p, vh)                      # (N*H, T, Dh)
    o = jnp.transpose(o, (1, 0, 2)).reshape(T, N, E)
    o = o @ params["w_out_t"] + params["b_out"][0]
    x = x + o

    xn2 = ln(x, params["n2_w"], params["n2_b"])
    h = jnp.maximum(xn2 @ params["w1_t"] + params["b1"][0], 0.0)
    x = x + (h @ params["w2_t"] + params["b2"][0])
    return x


if __name__ == "__main__":
    T, N, E, H = 8, 2, 32, 8
    key = jax.random.PRNGKey(0)
    k_src, k_par = jax.random.split(key)
    src = jax.random.normal(k_src, (T, N, E), jnp.float32)
    params = init_params(k_par, E)

    prepped = prepare_params(params, num_heads=H)      # prep / cast weights once, reuse
    out = temporal_encoder_layer(src, prepped, num_heads=H)
    out = jax.block_until_ready(out)

    ref = _reference(src, params, num_heads=H)
    assert out.shape == (T, N, E)
    err = float(jnp.max(jnp.abs(out - ref)))
    # bf16 MXU operands with f32 accumulation; f32 layernorm/softmax statistics.
    assert err < 3e-2, f"mismatch vs JAX reference: max abs err = {err}"

    print("KERNEL_OK")
</pallas_src>

<mosaic_0001>
module attributes {stable_mosaic.version = 11 : i64} {
  func.func @encoder_layer_kernel(%arg0: i32, %arg1: memref<16x32xf32, #tpu.memory_space<vmem>>, %arg2: memref<32x96xbf16, #tpu.memory_space<vmem>>, %arg3: memref<1x96xf32, #tpu.memory_space<vmem>>, %arg4: memref<32x32xbf16, #tpu.memory_space<vmem>>, %arg5: memref<1x32xf32, #tpu.memory_space<vmem>>, %arg6: memref<32x128xbf16, #tpu.memory_space<vmem>>, %arg7: memref<1x128xf32, #tpu.memory_space<vmem>>, %arg8: memref<128x32xbf16, #tpu.memory_space<vmem>>, %arg9: memref<1x32xf32, #tpu.memory_space<vmem>>, %arg10: memref<1x32xf32, #tpu.memory_space<vmem>>, %arg11: memref<1x32xf32, #tpu.memory_space<vmem>>, %arg12: memref<1x32xf32, #tpu.memory_space<vmem>>, %arg13: memref<1x32xf32, #tpu.memory_space<vmem>>, %arg14: memref<16x32xf32, #tpu.memory_space<vmem>>, %arg15: memref<16x32xf32, #tpu.memory_space<vmem>>) attributes {dimension_semantics = [#tpu.dimension_semantics<parallel>], iteration_bounds = array<i64: 1>, scalar_prefetch = 0 : i64, scratch_operands = 1 : i64, tpu.core_type = #tpu.core_type<tc>, window_params = [{transform_indices = @transform_0, window_bounds = array<i64: 16, 32>}, {pipeline_mode = #tpu.pipeline_mode<synchronous>, transform_indices = @transform_1, window_bounds = array<i64: 32, 96>}, {pipeline_mode = #tpu.pipeline_mode<synchronous>, transform_indices = @transform_2, window_bounds = array<i64: 1, 96>}, {pipeline_mode = #tpu.pipeline_mode<synchronous>, transform_indices = @transform_3, window_bounds = array<i64: 32, 32>}, {pipeline_mode = #tpu.pipeline_mode<synchronous>, transform_indices = @transform_4, window_bounds = array<i64: 1, 32>}, {pipeline_mode = #tpu.pipeline_mode<synchronous>, transform_indices = @transform_5, window_bounds = array<i64: 32, 128>}, {pipeline_mode = #tpu.pipeline_mode<synchronous>, transform_indices = @transform_6, window_bounds = array<i64: 1, 128>}, {pipeline_mode = #tpu.pipeline_mode<synchronous>, transform_indices = @transform_7, window_bounds = array<i64: 128, 32>}, {pipeline_mode = #tpu.pipeline_mode<synchronous>, transform_indices = @transform_8, window_bounds = array<i64: 1, 32>}, {pipeline_mode = #tpu.pipeline_mode<synchronous>, transform_indices = @transform_9, window_bounds = array<i64: 1, 32>}, {pipeline_mode = #tpu.pipeline_mode<synchronous>, transform_indices = @transform_10, window_bounds = array<i64: 1, 32>}, {pipeline_mode = #tpu.pipeline_mode<synchronous>, transform_indices = @transform_11, window_bounds = array<i64: 1, 32>}, {pipeline_mode = #tpu.pipeline_mode<synchronous>, transform_indices = @transform_12, window_bounds = array<i64: 1, 32>}, {transform_indices = @transform_13, window_bounds = array<i64: 16, 32>}]} {
    %c0 = arith.constant 0 : index
    %c0_0 = arith.constant 0 : index
    %0 = vector.load %arg1[%c0, %c0_0] : memref<16x32xf32, #tpu.memory_space<vmem>>, vector<16x32xf32>
    %1 = tpu.iota {dimensions = array<i32: 0>} : vector<16x16xi32>
    %2 = arith.sitofp %1 : vector<16x16xi32> to vector<16x16xf32>
    %3 = tpu.iota {dimensions = array<i32: 1>} : vector<16x16xi32>
    %4 = arith.sitofp %3 : vector<16x16xi32> to vector<16x16xf32>
    %cst = arith.constant 5.000000e-01 : f32
    %5 = vector.broadcast %cst : f32 to vector<16x16xf32>
    %6 = arith.addf %2, %5 : vector<16x16xf32>
    %cst_1 = arith.constant 1.250000e-01 : f32
    %7 = vector.broadcast %cst_1 : f32 to vector<16x16xf32>
    %8 = arith.mulf %6, %7 : vector<16x16xf32>
    %9 = math.floor %8 : vector<16x16xf32>
    %cst_2 = arith.constant 5.000000e-01 : f32
    %10 = vector.broadcast %cst_2 : f32 to vector<16x16xf32>
    %11 = arith.addf %4, %10 : vector<16x16xf32>
    %cst_3 = arith.constant 1.250000e-01 : f32
    %12 = vector.broadcast %cst_3 : f32 to vector<16x16xf32>
    %13 = arith.mulf %11, %12 : vector<16x16xf32>
    %14 = math.floor %13 : vector<16x16xf32>
    %15 = arith.cmpf oeq, %9, %14 : vector<16x16xf32>
    %cst_4 = arith.constant 0.000000e+00 : f32
    %cst_5 = arith.constant -1.000000e+30 : f32
    %16 = vector.broadcast %cst_4 : f32 to vector<16x16xf32>
    %17 = vector.broadcast %cst_5 : f32 to vector<16x16xf32>
    %18 = arith.select %15, %16, %17 : vector<16x16xi1>, vector<16x16xf32>
    %c0_6 = arith.constant 0 : index
    %c0_7 = arith.constant 0 : index
    %19 = vector.load %arg10[%c0_6, %c0_7] : memref<1x32xf32, #tpu.memory_space<vmem>>, vector<1x32xf32>
    %c0_8 = arith.constant 0 : index
    %c0_9 = arith.constant 0 : index
    %20 = vector.load %arg11[%c0_8, %c0_9] : memref<1x32xf32, #tpu.memory_space<vmem>>, vector<1x32xf32>
    %cst_10 = arith.constant dense<0.000000e+00> : vector<16xf32>
    %21 = vector.multi_reduction <add>, %0, %cst_10 [1] : vector<16x32xf32> to vector<16xf32>
    %22 = vector.shape_cast %21 : vector<16xf32> to vector<16x1xf32>
    %cst_11 = arith.constant 3.200000e+01 : f32
    %23 = vector.broadcast %cst_11 : f32 to vector<16x1xf32>
    %24 = arith.divf %22, %23 : vector<16x1xf32>
    %25 = vector.broadcast %24 : vector<16x1xf32> to vector<16x32xf32>
    %26 = arith.subf %0, %25 : vector<16x32xf32>
    %27 = arith.mulf %26, %26 : vector<16x32xf32>
    %cst_12 = arith.constant dense<0.000000e+00> : vector<16xf32>
    %28 = vector.multi_reduction <add>, %27, %cst_12 [1] : vector<16x32xf32> to vector<16xf32>
    %29 = vector.shape_cast %28 : vector<16xf32> to vector<16x1xf32>
    %cst_13 = arith.constant 3.200000e+01 : f32
    %30 = vector.broadcast %cst_13 : f32 to vector<16x1xf32>
    %31 = arith.divf %29, %30 : vector<16x1xf32>
    %32 = vector.broadcast %24 : vector<16x1xf32> to vector<16x32xf32>
    %33 = arith.subf %0, %32 : vector<16x32xf32>
    %cst_14 = arith.constant 9.99999974E-6 : f32
    %34 = vector.broadcast %cst_14 : f32 to vector<16x1xf32>
    %35 = arith.addf %31, %34 : vector<16x1xf32>
    %36 = math.rsqrt %35 : vector<16x1xf32>
    %37 = vector.broadcast %36 : vector<16x1xf32> to vector<16x32xf32>
    %38 = arith.mulf %33, %37 : vector<16x32xf32>
    %39 = vector.broadcast %19 : vector<1x32xf32> to vector<16x32xf32>
    %40 = arith.mulf %38, %39 : vector<16x32xf32>
    %41 = vector.broadcast %20 : vector<1x32xf32> to vector<16x32xf32>
    %42 = arith.addf %40, %41 : vector<16x32xf32>
    %43 = arith.truncf %42 : vector<16x32xf32> to vector<16x32xbf16>
    %c0_15 = arith.constant 0 : index
    %c0_16 = arith.constant 0 : index
    %44 = vector.load %arg2[%c0_15, %c0_16] : memref<32x96xbf16, #tpu.memory_space<vmem>>, vector<32x96xbf16>
    %cst_17 = arith.constant dense<0.000000e+00> : vector<16x96xf32>
    %45 = tpu.matmul %43, %44, %cst_17 {dimension_numbers = #tpu.dot_dimension_numbers<[1], [0], [0], [1], [0, 0, 1, 1], [], []>} : vector<16x32xbf16>, vector<32x96xbf16>, vector<16x96xf32> -> vector<16x96xf32>
    %c0_18 = arith.constant 0 : index
    %c0_19 = arith.constant 0 : index
    %46 = vector.load %arg3[%c0_18, %c0_19] : memref<1x96xf32, #tpu.memory_space<vmem>>, vector<1x96xf32>
    %47 = vector.broadcast %46 : vector<1x96xf32> to vector<16x96xf32>
    %48 = arith.addf %45, %47 : vector<16x96xf32>
    %49 = vector.extract_strided_slice %48 {offsets = [0, 0], sizes = [16, 4], strides = [1, 1]} : vector<16x96xf32> to vector<16x4xf32>
    %50 = arith.truncf %49 : vector<16x4xf32> to vector<16x4xbf16>
    %51 = vector.extract_strided_slice %48 {offsets = [0, 32], sizes = [16, 4], strides = [1, 1]} : vector<16x96xf32> to vector<16x4xf32>
    %52 = arith.truncf %51 : vector<16x4xf32> to vector<16x4xbf16>
    %53 = vector.extract_strided_slice %48 {offsets = [0, 64], sizes = [16, 4], strides = [1, 1]} : vector<16x96xf32> to vector<16x4xf32>
    %54 = arith.truncf %53 : vector<16x4xf32> to vector<16x4xbf16>
    %cst_20 = arith.constant dense<0.000000e+00> : vector<16x16xf32>
    %55 = tpu.matmul %50, %52, %cst_20 {dimension_numbers = #tpu.dot_dimension_numbers<[1], [1], [0], [0], [0, 0, 1, 0], [], []>} : vector<16x4xbf16>, vector<16x4xbf16>, vector<16x16xf32> -> vector<16x16xf32>
    %56 = arith.addf %55, %18 : vector<16x16xf32>
    %cst_21 = arith.constant dense<0xFF800000> : vector<16xf32>
    %57 = vector.multi_reduction <maximumf>, %56, %cst_21 [1] : vector<16x16xf32> to vector<16xf32>
    %58 = vector.shape_cast %57 : vector<16xf32> to vector<16x1xf32>
    %59 = vector.broadcast %58 : vector<16x1xf32> to vector<16x16xf32>
    %60 = arith.subf %56, %59 : vector<16x16xf32>
    %61 = math.exp %60 : vector<16x16xf32>
    %cst_22 = arith.constant dense<0.000000e+00> : vector<16xf32>
    %62 = vector.multi_reduction <add>, %61, %cst_22 [1] : vector<16x16xf32> to vector<16xf32>
    %63 = vector.shape_cast %62 : vector<16xf32> to vector<16x1xf32>
    %64 = tpu.reciprocal %63 {approx = true} : vector<16x1xf32> -> vector<16x1xf32>
    %65 = vector.broadcast %64 : vector<16x1xf32> to vector<16x16xf32>
    %66 = arith.mulf %61, %65 : vector<16x16xf32>
    %67 = arith.truncf %66 : vector<16x16xf32> to vector<16x16xbf16>
    %cst_23 = arith.constant dense<0.000000e+00> : vector<16x4xf32>
    %68 = tpu.matmul %67, %54, %cst_23 {dimension_numbers = #tpu.dot_dimension_numbers<[1], [0], [0], [1], [0, 0, 1, 1], [], []>} : vector<16x16xbf16>, vector<16x4xbf16>, vector<16x4xf32> -> vector<16x4xf32>
    %c0_24 = arith.constant 0 : index
    %c0_25 = arith.constant 0 : index
    %69 = vector.load %arg15[%c0_24, %c0_25] : memref<16x32xf32, #tpu.memory_space<vmem>>, vector<16x4xf32>
    tpu.vector_store %arg15[%c0_24, %c0_25], %68 {strides = array<i32>} : memref<16x32xf32, #tpu.memory_space<vmem>>, vector<16x4xf32>,
    %70 = vector.extract_strided_slice %48 {offsets = [0, 4], sizes = [16, 4], strides = [1, 1]} : vector<16x96xf32> to vector<16x4xf32>
    %71 = arith.truncf %70 : vector<16x4xf32> to vector<16x4xbf16>
    %72 = vector.extract_strided_slice %48 {offsets = [0, 36], sizes = [16, 4], strides = [1, 1]} : vector<16x96xf32> to vector<16x4xf32>
    %73 = arith.truncf %72 : vector<16x4xf32> to vector<16x4xbf16>
    %74 = vector.extract_strided_slice %48 {offsets = [0, 68], sizes = [16, 4], strides = [1, 1]} : vector<16x96xf32> to vector<16x4xf32>
    %75 = arith.truncf %74 : vector<16x4xf32> to vector<16x4xbf16>
    %cst_26 = arith.constant dense<0.000000e+00> : vector<16x16xf32>
    %76 = tpu.matmul %71, %73, %cst_26 {dimension_numbers = #tpu.dot_dimension_numbers<[1], [1], [0], [0], [0, 0, 1, 0], [], []>} : vector<16x4xbf16>, vector<16x4xbf16>, vector<16x16xf32> -> vector<16x16xf32>
    %77 = arith.addf %76, %18 : vector<16x16xf32>
    %cst_27 = arith.constant dense<0xFF800000> : vector<16xf32>
    %78 = vector.multi_reduction <maximumf>, %77, %cst_27 [1] : vector<16x16xf32> to vector<16xf32>
    %79 = vector.shape_cast %78 : vector<16xf32> to vector<16x1xf32>
    %80 = vector.broadcast %79 : vector<16x1xf32> to vector<16x16xf32>
    %81 = arith.subf %77, %80 : vector<16x16xf32>
    %82 = math.exp %81 : vector<16x16xf32>
    %cst_28 = arith.constant dense<0.000000e+00> : vector<16xf32>
    %83 = vector.multi_reduction <add>, %82, %cst_28 [1] : vector<16x16xf32> to vector<16xf32>
    %84 = vector.shape_cast %83 : vector<16xf32> to vector<16x1xf32>
    %85 = tpu.reciprocal %84 {approx = true} : vector<16x1xf32> -> vector<16x1xf32>
    %86 = vector.broadcast %85 : vector<16x1xf32> to vector<16x16xf32>
    %87 = arith.mulf %82, %86 : vector<16x16xf32>
    %88 = arith.truncf %87 : vector<16x16xf32> to vector<16x16xbf16>
    %cst_29 = arith.constant dense<0.000000e+00> : vector<16x4xf32>
    %89 = tpu.matmul %88, %75, %cst_29 {dimension_numbers = #tpu.dot_dimension_numbers<[1], [0], [0], [1], [0, 0, 1, 1], [], []>} : vector<16x16xbf16>, vector<16x4xbf16>, vector<16x4xf32> -> vector<16x4xf32>
    %c0_30 = arith.constant 0 : index
    %c4 = arith.constant 4 : index
    %90 = vector.load %arg15[%c0_30, %c4] : memref<16x32xf32, #tpu.memory_space<vmem>>, vector<16x4xf32>
    tpu.vector_store %arg15[%c0_30, %c4], %89 {strides = array<i32>} : memref<16x32xf32, #tpu.memory_space<vmem>>, vector<16x4xf32>,
    %91 = vector.extract_strided_slice %48 {offsets = [0, 8], sizes = [16, 4], strides = [1, 1]} : vector<16x96xf32> to vector<16x4xf32>
    %92 = arith.truncf %91 : vector<16x4xf32> to vector<16x4xbf16>
    %93 = vector.extract_strided_slice %48 {offsets = [0, 40], sizes = [16, 4], strides = [1, 1]} : vector<16x96xf32> to vector<16x4xf32>
    %94 = arith.truncf %93 : vector<16x4xf32> to vector<16x4xbf16>
    %95 = vector.extract_strided_slice %48 {offsets = [0, 72], sizes = [16, 4], strides = [1, 1]} : vector<16x96xf32> to vector<16x4xf32>
    %96 = arith.truncf %95 : vector<16x4xf32> to vector<16x4xbf16>
    %cst_31 = arith.constant dense<0.000000e+00> : vector<16x16xf32>
    %97 = tpu.matmul %92, %94, %cst_31 {dimension_numbers = #tpu.dot_dimension_numbers<[1], [1], [0], [0], [0, 0, 1, 0], [], []>} : vector<16x4xbf16>, vector<16x4xbf16>, vector<16x16xf32> -> vector<16x16xf32>
    %98 = arith.addf %97, %18 : vector<16x16xf32>
    %cst_32 = arith.constant dense<0xFF800000> : vector<16xf32>
    %99 = vector.multi_reduction <maximumf>, %98, %cst_32 [1] : vector<16x16xf32> to vector<16xf32>
    %100 = vector.shape_cast %99 : vector<16xf32> to vector<16x1xf32>
    %101 = vector.broadcast %100 : vector<16x1xf32> to vector<16x16xf32>
    %102 = arith.subf %98, %101 : vector<16x16xf32>
    %103 = math.exp %102 : vector<16x16xf32>
    %cst_33 = arith.constant dense<0.000000e+00> : vector<16xf32>
    %104 = vector.multi_reduction <add>, %103, %cst_33 [1] : vector<16x16xf32> to vector<16xf32>
    %105 = vector.shape_cast %104 : vector<16xf32> to vector<16x1xf32>
    %106 = tpu.reciprocal %105 {approx = true} : vector<16x1xf32> -> vector<16x1xf32>
    %107 = vector.broadcast %106 : vector<16x1xf32> to vector<16x16xf32>
    %108 = arith.mulf %103, %107 : vector<16x16xf32>
    %109 = arith.truncf %108 : vector<16x16xf32> to vector<16x16xbf16>
    %cst_34 = arith.constant dense<0.000000e+00> : vector<16x4xf32>
    %110 = tpu.matmul %109, %96, %cst_34 {dimension_numbers = #tpu.dot_dimension_numbers<[1], [0], [0], [1], [0, 0, 1, 1], [], []>} : vector<16x16xbf16>, vector<16x4xbf16>, vector<16x4xf32> -> vector<16x4xf32>
    %c0_35 = arith.constant 0 : index
    %c8 = arith.constant 8 : index
    %111 = vector.load %arg15[%c0_35, %c8] : memref<16x32xf32, #tpu.memory_space<vmem>>, vector<16x4xf32>
    tpu.vector_store %arg15[%c0_35, %c8], %110 {strides = array<i32>} : memref<16x32xf32, #tpu.memory_space<vmem>>, vector<16x4xf32>,
    %112 = vector.extract_strided_slice %48 {offsets = [0, 12], sizes = [16, 4], strides = [1, 1]} : vector<16x96xf32> to vector<16x4xf32>
    %113 = arith.truncf %112 : vector<16x4xf32> to vector<16x4xbf16>
    %114 = vector.extract_strided_slice %48 {offsets = [0, 44], sizes = [16, 4], strides = [1, 1]} : vector<16x96xf32> to vector<16x4xf32>
    %115 = arith.truncf %114 : vector<16x4xf32> to vector<16x4xbf16>
    %116 = vector.extract_strided_slice %48 {offsets = [0, 76], sizes = [16, 4], strides = [1, 1]} : vector<16x96xf32> to vector<16x4xf32>
    %117 = arith.truncf %116 : vector<16x4xf32> to vector<16x4xbf16>
    %cst_36 = arith.constant dense<0.000000e+00> : vector<16x16xf32>
    %118 = tpu.matmul %113, %115, %cst_36 {dimension_numbers = #tpu.dot_dimension_numbers<[1], [1], [0], [0], [0, 0, 1, 0], [], []>} : vector<16x4xbf16>, vector<16x4xbf16>, vector<16x16xf32> -> vector<16x16xf32>
    %119 = arith.addf %118, %18 : vector<16x16xf32>
    %cst_37 = arith.constant dense<0xFF800000> : vector<16xf32>
    %120 = vector.multi_reduction <maximumf>, %119, %cst_37 [1] : vector<16x16xf32> to vector<16xf32>
    %121 = vector.shape_cast %120 : vector<16xf32> to vector<16x1xf32>
    %122 = vector.broadcast %121 : vector<16x1xf32> to vector<16x16xf32>
    %123 = arith.subf %119, %122 : vector<16x16xf32>
    %124 = math.exp %123 : vector<16x16xf32>
    %cst_38 = arith.constant dense<0.000000e+00> : vector<16xf32>
    %125 = vector.multi_reduction <add>, %124, %cst_38 [1] : vector<16x16xf32> to vector<16xf32>
    %126 = vector.shape_cast %125 : vector<16xf32> to vector<16x1xf32>
    %127 = tpu.reciprocal %126 {approx = true} : vector<16x1xf32> -> vector<16x1xf32>
    %128 = vector.broadcast %127 : vector<16x1xf32> to vector<16x16xf32>
    %129 = arith.mulf %124, %128 : vector<16x16xf32>
    %130 = arith.truncf %129 : vector<16x16xf32> to vector<16x16xbf16>
    %cst_39 = arith.constant dense<0.000000e+00> : vector<16x4xf32>
    %131 = tpu.matmul %130, %117, %cst_39 {dimension_numbers = #tpu.dot_dimension_numbers<[1], [0], [0], [1], [0, 0, 1, 1], [], []>} : vector<16x16xbf16>, vector<16x4xbf16>, vector<16x4xf32> -> vector<16x4xf32>
    %c0_40 = arith.constant 0 : index
    %c12 = arith.constant 12 : index
    %132 = vector.load %arg15[%c0_40, %c12] : memref<16x32xf32, #tpu.memory_space<vmem>>, vector<16x4xf32>
    tpu.vector_store %arg15[%c0_40, %c12], %131 {strides = array<i32>} : memref<16x32xf32, #tpu.memory_space<vmem>>, vector<16x4xf32>,
    %133 = vector.extract_strided_slice %48 {offsets = [0, 16], sizes = [16, 4], strides = [1, 1]} : vector<16x96xf32> to vector<16x4xf32>
    %134 = arith.truncf %133 : vector<16x4xf32> to vector<16x4xbf16>
    %135 = vector.extract_strided_slice %48 {offsets = [0, 48], sizes = [16, 4], strides = [1, 1]} : vector<16x96xf32> to vector<16x4xf32>
    %136 = arith.truncf %135 : vector<16x4xf32> to vector<16x4xbf16>
    %137 = vector.extract_strided_slice %48 {offsets = [0, 80], sizes = [16, 4], strides = [1, 1]} : vector<16x96xf32> to vector<16x4xf32>
    %138 = arith.truncf %137 : vector<16x4xf32> to vector<16x4xbf16>
    %cst_41 = arith.constant dense<0.000000e+00> : vector<16x16xf32>
    %139 = tpu.matmul %134, %136, %cst_41 {dimension_numbers = #tpu.dot_dimension_numbers<[1], [1], [0], [0], [0, 0, 1, 0], [], []>} : vector<16x4xbf16>, vector<16x4xbf16>, vector<16x16xf32> -> vector<16x16xf32>
    %140 = arith.addf %139, %18 : vector<16x16xf32>
    %cst_42 = arith.constant dense<0xFF800000> : vector<16xf32>
    %141 = vector.multi_reduction <maximumf>, %140, %cst_42 [1] : vector<16x16xf32> to vector<16xf32>
    %142 = vector.shape_cast %141 : vector<16xf32> to vector<16x1xf32>
    %143 = vector.broadcast %142 : vector<16x1xf32> to vector<16x16xf32>
    %144 = arith.subf %140, %143 : vector<16x16xf32>
    %145 = math.exp %144 : vector<16x16xf32>
    %cst_43 = arith.constant dense<0.000000e+00> : vector<16xf32>
    %146 = vector.multi_reduction <add>, %145, %cst_43 [1] : vector<16x16xf32> to vector<16xf32>
    %147 = vector.shape_cast %146 : vector<16xf32> to vector<16x1xf32>
    %148 = tpu.reciprocal %147 {approx = true} : vector<16x1xf32> -> vector<16x1xf32>
    %149 = vector.broadcast %148 : vector<16x1xf32> to vector<16x16xf32>
    %150 = arith.mulf %145, %149 : vector<16x16xf32>
    %151 = arith.truncf %150 : vector<16x16xf32> to vector<16x16xbf16>
    %cst_44 = arith.constant dense<0.000000e+00> : vector<16x4xf32>
    %152 = tpu.matmul %151, %138, %cst_44 {dimension_numbers = #tpu.dot_dimension_numbers<[1], [0], [0], [1], [0, 0, 1, 1], [], []>} : vector<16x16xbf16>, vector<16x4xbf16>, vector<16x4xf32> -> vector<16x4xf32>
    %c0_45 = arith.constant 0 : index
    %c16 = arith.constant 16 : index
    %153 = vector.load %arg15[%c0_45, %c16] : memref<16x32xf32, #tpu.memory_space<vmem>>, vector<16x4xf32>
    tpu.vector_store %arg15[%c0_45, %c16], %152 {strides = array<i32>} : memref<16x32xf32, #tpu.memory_space<vmem>>, vector<16x4xf32>,
    %154 = vector.extract_strided_slice %48 {offsets = [0, 20], sizes = [16, 4], strides = [1, 1]} : vector<16x96xf32> to vector<16x4xf32>
    %155 = arith.truncf %154 : vector<16x4xf32> to vector<16x4xbf16>
    %156 = vector.extract_strided_slice %48 {offsets = [0, 52], sizes = [16, 4], strides = [1, 1]} : vector<16x96xf32> to vector<16x4xf32>
    %157 = arith.truncf %156 : vector<16x4xf32> to vector<16x4xbf16>
    %158 = vector.extract_strided_slice %48 {offsets = [0, 84], sizes = [16, 4], strides = [1, 1]} : vector<16x96xf32> to vector<16x4xf32>
    %159 = arith.truncf %158 : vector<16x4xf32> to vector<16x4xbf16>
    %cst_46 = arith.constant dense<0.000000e+00> : vector<16x16xf32>
    %160 = tpu.matmul %155, %157, %cst_46 {dimension_numbers = #tpu.dot_dimension_numbers<[1], [1], [0], [0], [0, 0, 1, 0], [], []>} : vector<16x4xbf16>, vector<16x4xbf16>, vector<16x16xf32> -> vector<16x16xf32>
    %161 = arith.addf %160, %18 : vector<16x16xf32>
    %cst_47 = arith.constant dense<0xFF800000> : vector<16xf32>
    %162 = vector.multi_reduction <maximumf>, %161, %cst_47 [1] : vector<16x16xf32> to vector<16xf32>
    %163 = vector.shape_cast %162 : vector<16xf32> to vector<16x1xf32>
    %164 = vector.broadcast %163 : vector<16x1xf32> to vector<16x16xf32>
    %165 = arith.subf %161, %164 : vector<16x16xf32>
    %166 = math.exp %165 : vector<16x16xf32>
    %cst_48 = arith.constant dense<0.000000e+00> : vector<16xf32>
    %167 = vector.multi_reduction <add>, %166, %cst_48 [1] : vector<16x16xf32> to vector<16xf32>
    %168 = vector.shape_cast %167 : vector<16xf32> to vector<16x1xf32>
    %169 = tpu.reciprocal %168 {approx = true} : vector<16x1xf32> -> vector<16x1xf32>
    %170 = vector.broadcast %169 : vector<16x1xf32> to vector<16x16xf32>
    %171 = arith.mulf %166, %170 : vector<16x16xf32>
    %172 = arith.truncf %171 : vector<16x16xf32> to vector<16x16xbf16>
    %cst_49 = arith.constant dense<0.000000e+00> : vector<16x4xf32>
    %173 = tpu.matmul %172, %159, %cst_49 {dimension_numbers = #tpu.dot_dimension_numbers<[1], [0], [0], [1], [0, 0, 1, 1], [], []>} : vector<16x16xbf16>, vector<16x4xbf16>, vector<16x4xf32> -> vector<16x4xf32>
    %c0_50 = arith.constant 0 : index
    %c20 = arith.constant 20 : index
    %174 = vector.load %arg15[%c0_50, %c20] : memref<16x32xf32, #tpu.memory_space<vmem>>, vector<16x4xf32>
    tpu.vector_store %arg15[%c0_50, %c20], %173 {strides = array<i32>} : memref<16x32xf32, #tpu.memory_space<vmem>>, vector<16x4xf32>,
    %175 = vector.extract_strided_slice %48 {offsets = [0, 24], sizes = [16, 4], strides = [1, 1]} : vector<16x96xf32> to vector<16x4xf32>
    %176 = arith.truncf %175 : vector<16x4xf32> to vector<16x4xbf16>
    %177 = vector.extract_strided_slice %48 {offsets = [0, 56], sizes = [16, 4], strides = [1, 1]} : vector<16x96xf32> to vector<16x4xf32>
    %178 = arith.truncf %177 : vector<16x4xf32> to vector<16x4xbf16>
    %179 = vector.extract_strided_slice %48 {offsets = [0, 88], sizes = [16, 4], strides = [1, 1]} : vector<16x96xf32> to vector<16x4xf32>
    %180 = arith.truncf %179 : vector<16x4xf32> to vector<16x4xbf16>
    %cst_51 = arith.constant dense<0.000000e+00> : vector<16x16xf32>
    %181 = tpu.matmul %176, %178, %cst_51 {dimension_numbers = #tpu.dot_dimension_numbers<[1], [1], [0], [0], [0, 0, 1, 0], [], []>} : vector<16x4xbf16>, vector<16x4xbf16>, vector<16x16xf32> -> vector<16x16xf32>
    %182 = arith.addf %181, %18 : vector<16x16xf32>
    %cst_52 = arith.constant dense<0xFF800000> : vector<16xf32>
    %183 = vector.multi_reduction <maximumf>, %182, %cst_52 [1] : vector<16x16xf32> to vector<16xf32>
    %184 = vector.shape_cast %183 : vector<16xf32> to vector<16x1xf32>
    %185 = vector.broadcast %184 : vector<16x1xf32> to vector<16x16xf32>
    %186 = arith.subf %182, %185 : vector<16x16xf32>
    %187 = math.exp %186 : vector<16x16xf32>
    %cst_53 = arith.constant dense<0.000000e+00> : vector<16xf32>
    %188 = vector.multi_reduction <add>, %187, %cst_53 [1] : vector<16x16xf32> to vector<16xf32>
    %189 = vector.shape_cast %188 : vector<16xf32> to vector<16x1xf32>
    %190 = tpu.reciprocal %189 {approx = true} : vector<16x1xf32> -> vector<16x1xf32>
    %191 = vector.broadcast %190 : vector<16x1xf32> to vector<16x16xf32>
    %192 = arith.mulf %187, %191 : vector<16x16xf32>
    %193 = arith.truncf %192 : vector<16x16xf32> to vector<16x16xbf16>
    %cst_54 = arith.constant dense<0.000000e+00> : vector<16x4xf32>
    %194 = tpu.matmul %193, %180, %cst_54 {dimension_numbers = #tpu.dot_dimension_numbers<[1], [0], [0], [1], [0, 0, 1, 1], [], []>} : vector<16x16xbf16>, vector<16x4xbf16>, vector<16x4xf32> -> vector<16x4xf32>
    %c0_55 = arith.constant 0 : index
    %c24 = arith.constant 24 : index
    %195 = vector.load %arg15[%c0_55, %c24] : memref<16x32xf32, #tpu.memory_space<vmem>>, vector<16x4xf32>
    tpu.vector_store %arg15[%c0_55, %c24], %194 {strides = array<i32>} : memref<16x32xf32, #tpu.memory_space<vmem>>, vector<16x4xf32>,
    %196 = vector.extract_strided_slice %48 {offsets = [0, 28], sizes = [16, 4], strides = [1, 1]} : vector<16x96xf32> to vector<16x4xf32>
    %197 = arith.truncf %196 : vector<16x4xf32> to vector<16x4xbf16>
    %198 = vector.extract_strided_slice %48 {offsets = [0, 60], sizes = [16, 4], strides = [1, 1]} : vector<16x96xf32> to vector<16x4xf32>
    %199 = arith.truncf %198 : vector<16x4xf32> to vector<16x4xbf16>
    %200 = vector.extract_strided_slice %48 {offsets = [0, 92], sizes = [16, 4], strides = [1, 1]} : vector<16x96xf32> to vector<16x4xf32>
    %201 = arith.truncf %200 : vector<16x4xf32> to vector<16x4xbf16>
    %cst_56 = arith.constant dense<0.000000e+00> : vector<16x16xf32>
    %202 = tpu.matmul %197, %199, %cst_56 {dimension_numbers = #tpu.dot_dimension_numbers<[1], [1], [0], [0], [0, 0, 1, 0], [], []>} : vector<16x4xbf16>, vector<16x4xbf16>, vector<16x16xf32> -> vector<16x16xf32>
    %203 = arith.addf %202, %18 : vector<16x16xf32>
    %cst_57 = arith.constant dense<0xFF800000> : vector<16xf32>
    %204 = vector.multi_reduction <maximumf>, %203, %cst_57 [1] : vector<16x16xf32> to vector<16xf32>
    %205 = vector.shape_cast %204 : vector<16xf32> to vector<16x1xf32>
    %206 = vector.broadcast %205 : vector<16x1xf32> to vector<16x16xf32>
    %207 = arith.subf %203, %206 : vector<16x16xf32>
    %208 = math.exp %207 : vector<16x16xf32>
    %cst_58 = arith.constant dense<0.000000e+00> : vector<16xf32>
    %209 = vector.multi_reduction <add>, %208, %cst_58 [1] : vector<16x16xf32> to vector<16xf32>
    %210 = vector.shape_cast %209 : vector<16xf32> to vector<16x1xf32>
    %211 = tpu.reciprocal %210 {approx = true} : vector<16x1xf32> -> vector<16x1xf32>
    %212 = vector.broadcast %211 : vector<16x1xf32> to vector<16x16xf32>
    %213 = arith.mulf %208, %212 : vector<16x16xf32>
    %214 = arith.truncf %213 : vector<16x16xf32> to vector<16x16xbf16>
    %cst_59 = arith.constant dense<0.000000e+00> : vector<16x4xf32>
    %215 = tpu.matmul %214, %201, %cst_59 {dimension_numbers = #tpu.dot_dimension_numbers<[1], [0], [0], [1], [0, 0, 1, 1], [], []>} : vector<16x16xbf16>, vector<16x4xbf16>, vector<16x4xf32> -> vector<16x4xf32>
    %c0_60 = arith.constant 0 : index
    %c28 = arith.constant 28 : index
    %216 = vector.load %arg15[%c0_60, %c28] : memref<16x32xf32, #tpu.memory_space<vmem>>, vector<16x4xf32>
    tpu.vector_store %arg15[%c0_60, %c28], %215 {strides = array<i32>} : memref<16x32xf32, #tpu.memory_space<vmem>>, vector<16x4xf32>,
    %c0_61 = arith.constant 0 : index
    %c0_62 = arith.constant 0 : index
    %217 = vector.load %arg15[%c0_61, %c0_62] : memref<16x32xf32, #tpu.memory_space<vmem>>, vector<16x32xf32>
    %218 = arith.truncf %217 : vector<16x32xf32> to vector<16x32xbf16>
    %c0_63 = arith.constant 0 : index
    %c0_64 = arith.constant 0 : index
    %219 = vector.load %arg4[%c0_63, %c0_64] : memref<32x32xbf16, #tpu.memory_space<vmem>>, vector<32x32xbf16>
    %cst_65 = arith.constant dense<0.000000e+00> : vector<16x32xf32>
    %220 = tpu.matmul %218, %219, %cst_65 {dimension_numbers = #tpu.dot_dimension_numbers<[1], [0], [0], [1], [0, 0, 1, 1], [], []>} : vector<16x32xbf16>, vector<32x32xbf16>, vector<16x32xf32> -> vector<16x32xf32>
    %c0_66 = arith.constant 0 : index
    %c0_67 = arith.constant 0 : index
    %221 = vector.load %arg5[%c0_66, %c0_67] : memref<1x32xf32, #tpu.memory_space<vmem>>, vector<1x32xf32>
    %222 = vector.broadcast %221 : vector<1x32xf32> to vector<16x32xf32>
    %223 = arith.addf %220, %222 : vector<16x32xf32>
    %224 = arith.addf %0, %223 : vector<16x32xf32>
    %c0_68 = arith.constant 0 : index
    %c0_69 = arith.constant 0 : index
    %225 = vector.load %arg12[%c0_68, %c0_69] : memref<1x32xf32, #tpu.memory_space<vmem>>, vector<1x32xf32>
    %c0_70 = arith.constant 0 : index
    %c0_71 = arith.constant 0 : index
    %226 = vector.load %arg13[%c0_70, %c0_71] : memref<1x32xf32, #tpu.memory_space<vmem>>, vector<1x32xf32>
    %cst_72 = arith.constant dense<0.000000e+00> : vector<16xf32>
    %227 = vector.multi_reduction <add>, %224, %cst_72 [1] : vector<16x32xf32> to vector<16xf32>
    %228 = vector.shape_cast %227 : vector<16xf32> to vector<16x1xf32>
    %cst_73 = arith.constant 3.200000e+01 : f32
    %229 = vector.broadcast %cst_73 : f32 to vector<16x1xf32>
    %230 = arith.divf %228, %229 : vector<16x1xf32>
    %231 = vector.broadcast %230 : vector<16x1xf32> to vector<16x32xf32>
    %232 = arith.subf %224, %231 : vector<16x32xf32>
    %233 = arith.mulf %232, %232 : vector<16x32xf32>
    %cst_74 = arith.constant dense<0.000000e+00> : vector<16xf32>
    %234 = vector.multi_reduction <add>, %233, %cst_74 [1] : vector<16x32xf32> to vector<16xf32>
    %235 = vector.shape_cast %234 : vector<16xf32> to vector<16x1xf32>
    %cst_75 = arith.constant 3.200000e+01 : f32
    %236 = vector.broadcast %cst_75 : f32 to vector<16x1xf32>
    %237 = arith.divf %235, %236 : vector<16x1xf32>
    %238 = vector.broadcast %230 : vector<16x1xf32> to vector<16x32xf32>
    %239 = arith.subf %224, %238 : vector<16x32xf32>
    %cst_76 = arith.constant 9.99999974E-6 : f32
    %240 = vector.broadcast %cst_76 : f32 to vector<16x1xf32>
    %241 = arith.addf %237, %240 : vector<16x1xf32>
    %242 = math.rsqrt %241 : vector<16x1xf32>
    %243 = vector.broadcast %242 : vector<16x1xf32> to vector<16x32xf32>
    %244 = arith.mulf %239, %243 : vector<16x32xf32>
    %245 = vector.broadcast %225 : vector<1x32xf32> to vector<16x32xf32>
    %246 = arith.mulf %244, %245 : vector<16x32xf32>
    %247 = vector.broadcast %226 : vector<1x32xf32> to vector<16x32xf32>
    %248 = arith.addf %246, %247 : vector<16x32xf32>
    %249 = arith.truncf %248 : vector<16x32xf32> to vector<16x32xbf16>
    %c0_77 = arith.constant 0 : index
    %c0_78 = arith.constant 0 : index
    %250 = vector.load %arg6[%c0_77, %c0_78] : memref<32x128xbf16, #tpu.memory_space<vmem>>, vector<32x128xbf16>
    %cst_79 = arith.constant dense<0.000000e+00> : vector<16x128xf32>
    %251 = tpu.matmul %249, %250, %cst_79 {dimension_numbers = #tpu.dot_dimension_numbers<[1], [0], [0], [1], [0, 0, 1, 1], [], []>} : vector<16x32xbf16>, vector<32x128xbf16>, vector<16x128xf32> -> vector<16x128xf32>
    %c0_80 = arith.constant 0 : index
    %c0_81 = arith.constant 0 : index
    %252 = vector.load %arg7[%c0_80, %c0_81] : memref<1x128xf32, #tpu.memory_space<vmem>>, vector<1x128xf32>
    %253 = vector.broadcast %252 : vector<1x128xf32> to vector<16x128xf32>
    %254 = arith.addf %251, %253 : vector<16x128xf32>
    %cst_82 = arith.constant 0.000000e+00 : f32
    %255 = vector.broadcast %cst_82 : f32 to vector<16x128xf32>
    %256 = arith.maximumf %254, %255 : vector<16x128xf32>
    %257 = arith.truncf %256 : vector<16x128xf32> to vector<16x128xbf16>
    %c0_83 = arith.constant 0 : index
    %c0_84 = arith.constant 0 : index
    %258 = vector.load %arg8[%c0_83, %c0_84] : memref<128x32xbf16, #tpu.memory_space<vmem>>, vector<128x32xbf16>
    %cst_85 = arith.constant dense<0.000000e+00> : vector<16x32xf32>
    %259 = tpu.matmul %257, %258, %cst_85 {dimension_numbers = #tpu.dot_dimension_numbers<[1], [0], [0], [1], [0, 0, 1, 1], [], []>} : vector<16x128xbf16>, vector<128x32xbf16>, vector<16x32xf32> -> vector<16x32xf32>
    %c0_86 = arith.constant 0 : index
    %c0_87 = arith.constant 0 : index
    %260 = vector.load %arg9[%c0_86, %c0_87] : memref<1x32xf32, #tpu.memory_space<vmem>>, vector<1x32xf32>
    %261 = vector.broadcast %260 : vector<1x32xf32> to vector<16x32xf32>
    %262 = arith.addf %259, %261 : vector<16x32xf32>
    %263 = arith.addf %224, %262 : vector<16x32xf32>
    %c0_88 = arith.constant 0 : index
    %c0_89 = arith.constant 0 : index
    %264 = vector.load %arg14[%c0_88, %c0_89] : memref<16x32xf32, #tpu.memory_space<vmem>>, vector<16x32xf32>
    tpu.vector_store %arg14[%c0_88, %c0_89], %263 {strides = array<i32>} : memref<16x32xf32, #tpu.memory_space<vmem>>, vector<16x32xf32>,
    return
  }
  func.func @transform_0(%arg0: i32) -> (i32, i32) {
    %c0_i32 = arith.constant 0 : i32
    %c0_i32_0 = arith.constant 0 : i32
    return %arg0, %c0_i32 : i32, i32
  }
  func.func @transform_1(%arg0: i32) -> (i32, i32) {
    %c0_i32 = arith.constant 0 : i32
    %c0_i32_0 = arith.constant 0 : i32
    %c0_i32_1 = arith.constant 0 : i32
    return %c0_i32, %c0_i32_0 : i32, i32
  }
  func.func @transform_2(%arg0: i32) -> (i32, i32) {
    %c0_i32 = arith.constant 0 : i32
    %c0_i32_0 = arith.constant 0 : i32
    %c0_i32_1 = arith.constant 0 : i32
    return %c0_i32, %c0_i32_0 : i32, i32
  }
  func.func @transform_3(%arg0: i32) -> (i32, i32) {
    %c0_i32 = arith.constant 0 : i32
    %c0_i32_0 = arith.constant 0 : i32
    %c0_i32_1 = arith.constant 0 : i32
    return %c0_i32, %c0_i32_0 : i32, i32
  }
  func.func @transform_4(%arg0: i32) -> (i32, i32) {
    %c0_i32 = arith.constant 0 : i32
    %c0_i32_0 = arith.constant 0 : i32
    %c0_i32_1 = arith.constant 0 : i32
    return %c0_i32, %c0_i32_0 : i32, i32
  }
  func.func @transform_5(%arg0: i32) -> (i32, i32) {
    %c0_i32 = arith.constant 0 : i32
    %c0_i32_0 = arith.constant 0 : i32
    %c0_i32_1 = arith.constant 0 : i32
    return %c0_i32, %c0_i32_0 : i32, i32
  }
  func.func @transform_6(%arg0: i32) -> (i32, i32) {
    %c0_i32 = arith.constant 0 : i32
    %c0_i32_0 = arith.constant 0 : i32
    %c0_i32_1 = arith.constant 0 : i32
    return %c0_i32, %c0_i32_0 : i32, i32
  }
  func.func @transform_7(%arg0: i32) -> (i32, i32) {
    %c0_i32 = arith.constant 0 : i32
    %c0_i32_0 = arith.constant 0 : i32
    %c0_i32_1 = arith.constant 0 : i32
    return %c0_i32, %c0_i32_0 : i32, i32
  }
  func.func @transform_8(%arg0: i32) -> (i32, i32) {
    %c0_i32 = arith.constant 0 : i32
    %c0_i32_0 = arith.constant 0 : i32
    %c0_i32_1 = arith.constant 0 : i32
    return %c0_i32, %c0_i32_0 : i32, i32
  }
  func.func @transform_9(%arg0: i32) -> (i32, i32) {
    %c0_i32 = arith.constant 0 : i32
    %c0_i32_0 = arith.constant 0 : i32
    %c0_i32_1 = arith.constant 0 : i32
    return %c0_i32, %c0_i32_0 : i32, i32
  }
  func.func @transform_10(%arg0: i32) -> (i32, i32) {
    %c0_i32 = arith.constant 0 : i32
    %c0_i32_0 = arith.constant 0 : i32
    %c0_i32_1 = arith.constant 0 : i32
    return %c0_i32, %c0_i32_0 : i32, i32
  }
  func.func @transform_11(%arg0: i32) -> (i32, i32) {
    %c0_i32 = arith.constant 0 : i32
    %c0_i32_0 = arith.constant 0 : i32
    %c0_i32_1 = arith.constant 0 : i32
    return %c0_i32, %c0_i32_0 : i32, i32
  }
  func.func @transform_12(%arg0: i32) -> (i32, i32) {
    %c0_i32 = arith.constant 0 : i32
    %c0_i32_0 = arith.constant 0 : i32
    %c0_i32_1 = arith.constant 0 : i32
    return %c0_i32, %c0_i32_0 : i32, i32
  }
  func.func @transform_13(%arg0: i32) -> (i32, i32) {
    %c0_i32 = arith.constant 0 : i32
    %c0_i32_0 = arith.constant 0 : i32
    return %arg0, %c0_i32 : i32, i32
  }
}

</mosaic_0001>

<llo_original>
// kernel: tpu_custom_call.1
$region0: #{tpu_custom_call.1}
  #allocation0 [shape = 'u32[]', space=smem, size = 0x4, offset = 0x4, fixed_abs, tag = 'smem constant byte address 0x4 - core index']
  #allocation1 [shape = 'u32[144,128]{1,0:T(1,128)}', space=vmem, size = 0x12000, scoped, tag = 'internal scratch']
  #allocation2 [shape = 'f32[16,32]{1,0:T(8,128)}', space=vmem, size = 0x2000, scoped, tag = 'scratch operand']
  %s0 = inlined_call_operand.vmem [shape: f32[16,32], index: 0, kind: input, shape index: {}]
  %s1 = inlined_call_operand.vmem [shape: bf16[32,96], index: 1, kind: input, shape index: {}]
  %s2 = inlined_call_operand.vmem [shape: f32[1,96], index: 2, kind: input, shape index: {}]
  %s3 = inlined_call_operand.vmem [shape: bf16[32,32], index: 3, kind: input, shape index: {}]
  %s4 = inlined_call_operand.vmem [shape: f32[1,32], index: 4, kind: input, shape index: {}]
  %s5 = inlined_call_operand.vmem [shape: bf16[32,128], index: 5, kind: input, shape index: {}]
  %s6 = inlined_call_operand.vmem [shape: f32[1,128], index: 6, kind: input, shape index: {}]
  %s7 = inlined_call_operand.vmem [shape: bf16[128,32], index: 7, kind: input, shape index: {}]
  %s8 = inlined_call_operand.vmem [shape: f32[1,32], index: 8, kind: input, shape index: {}]
  %s9 = inlined_call_operand.vmem [shape: f32[1,32], index: 9, kind: input, shape index: {}]
  %s10 = inlined_call_operand.vmem [shape: f32[1,32], index: 10, kind: input, shape index: {}]
  %s11 = inlined_call_operand.vmem [shape: f32[1,32], index: 11, kind: input, shape index: {}]
  %s12 = inlined_call_operand.vmem [shape: f32[1,32], index: 12, kind: input, shape index: {}]
  %s13 = inlined_call_operand.hbm [shape: f32[16,32], index: 13, kind: output, shape index: {}]
  %s14 = sld [smem:[#allocation0]]
  $region62: #{tpu_custom_call.1} parent=0
    _
  %s16 = ssub.s32 1, %s14
  %s17 = scalar_select 0, %s16, %s14
  $region1: #{tpu_custom_call.1} parent=0
    #allocation3 [shape = 'u8[8192]{0}', space=vmem, size = 0x2000, scoped, tag = 'output window, operand 0, single buffered']
    #allocation4 [shape = 's32[1]{0}', space=sflag, size = 0x4, scoped, tag = 'scoped memory for tpu_custom_call.1']
    %18 = vsyncpa [#allocation4], 0
    // Predicated region
    $region2: #{tpu_custom_call.1} parent=1 // pred_check
      _
    $region3: #{tpu_custom_call.1} parent=1 // pred_check_branch
      %20 = sbr.rel (0) target = $region5
    $region4: #{tpu_custom_call.1} parent=1 // pred_region
      _
    $region5: #{tpu_custom_call.1} parent=1 // pred_fallthru
      _
    // Predicated region
    $region6: #{tpu_custom_call.1} parent=1 // pred_check
      _
    $region7: #{tpu_custom_call.1} parent=1 // pred_check_branch
      %22 = sbr.rel (0) target = $region9
    $region8: #{tpu_custom_call.1} parent=1 // pred_region
      _
    $region9: #{tpu_custom_call.1} parent=1 // pred_fallthru
      _
    // Predicated region
    $region10: #{tpu_custom_call.1} parent=1 // pred_check
      _
    $region11: #{tpu_custom_call.1} parent=1 // pred_check_branch
      %24 = sbr.rel (0) target = $region13
    $region12: #{tpu_custom_call.1} parent=1 // pred_region
      _
    $region13: #{tpu_custom_call.1} parent=1 // pred_fallthru
      _
    // Predicated region
    $region14: #{tpu_custom_call.1} parent=1 // pred_check
      _
    $region15: #{tpu_custom_call.1} parent=1 // pred_check_branch
      %26 = sbr.rel (0) target = $region17
    $region16: #{tpu_custom_call.1} parent=1 // pred_region
      _
    $region17: #{tpu_custom_call.1} parent=1 // pred_fallthru
      _
    // Predicated region
    $region18: #{tpu_custom_call.1} parent=1 // pred_check
      _
    $region19: #{tpu_custom_call.1} parent=1 // pred_check_branch
      %28 = sbr.rel (0) target = $region21
    $region20: #{tpu_custom_call.1} parent=1 // pred_region
      _
    $region21: #{tpu_custom_call.1} parent=1 // pred_fallthru
      _
    // Predicated region
    $region22: #{tpu_custom_call.1} parent=1 // pred_check
      _
    $region23: #{tpu_custom_call.1} parent=1 // pred_check_branch
      %30 = sbr.rel (0) target = $region25
    $region24: #{tpu_custom_call.1} parent=1 // pred_region
      _
    $region25: #{tpu_custom_call.1} parent=1 // pred_fallthru
      _
    // Predicated region
    $region26: #{tpu_custom_call.1} parent=1 // pred_check
      _
    $region27: #{tpu_custom_call.1} parent=1 // pred_check_branch
      %32 = sbr.rel (0) target = $region29
    $region28: #{tpu_custom_call.1} parent=1 // pred_region
      _
    $region29: #{tpu_custom_call.1} parent=1 // pred_fallthru
      _
    // Predicated region
    $region30: #{tpu_custom_call.1} parent=1 // pred_check
      _
    $region31: #{tpu_custom_call.1} parent=1 // pred_check_branch
      %34 = sbr.rel (0) target = $region33
    $region32: #{tpu_custom_call.1} parent=1 // pred_region
      _
    $region33: #{tpu_custom_call.1} parent=1 // pred_fallthru
      _
    // Predicated region
    $region34: #{tpu_custom_call.1} parent=1 // pred_check
      _
    $region35: #{tpu_custom_call.1} parent=1 // pred_check_branch
      %36 = sbr.rel (0) target = $region37
    $region36: #{tpu_custom_call.1} parent=1 // pred_region
      _
    $region37: #{tpu_custom_call.1} parent=1 // pred_fallthru
      _
    // Predicated region
    $region38: #{tpu_custom_call.1} parent=1 // pred_check
      _
    $region39: #{tpu_custom_call.1} parent=1 // pred_check_branch
      %38 = sbr.rel (0) target = $region41
    $region40: #{tpu_custom_call.1} parent=1 // pred_region
      _
    $region41: #{tpu_custom_call.1} parent=1 // pred_fallthru
      _
    // Predicated region
    $region42: #{tpu_custom_call.1} parent=1 // pred_check
      _
    $region43: #{tpu_custom_call.1} parent=1 // pred_check_branch
      %40 = sbr.rel (0) target = $region45
    $region44: #{tpu_custom_call.1} parent=1 // pred_region
      _
    $region45: #{tpu_custom_call.1} parent=1 // pred_fallthru
      _
    // Predicated region
    $region46: #{tpu_custom_call.1} parent=1 // pred_check
      _
    $region47: #{tpu_custom_call.1} parent=1 // pred_check_branch
      %42 = sbr.rel (0) target = $region49
    $region48: #{tpu_custom_call.1} parent=1 // pred_region
      _
    $region49: #{tpu_custom_call.1} parent=1 // pred_fallthru
      _
    // Predicated region
    $region50: #{tpu_custom_call.1} parent=1 // pred_check
      _
    $region51: #{tpu_custom_call.1} parent=1 // pred_check_branch
      %44 = sbr.rel (0) target = $region53
    $region52: #{tpu_custom_call.1} parent=1 // pred_region
      _
    $region53: #{tpu_custom_call.1} parent=1 // pred_fallthru
      _
    %v46 = vld [vmem:[%s0] sm:$0xff]
    %v47 = vld [vmem:[%s0 + $0x8] sm:$0xff]
    %v48 = vlaneseq
    %v49 = vshrl.u32 %v48, 7
    %v50 = vadd.s32 %v49, 8
    %v51 = vcvt.s32.f32 %v49
    %v52 = vcvt.s32.f32 %v50
    %v53 = vlaneseq
    %v54 = vand.u32 %v53, 127
    %v55 = vcvt.s32.f32 %v54
    %v56 = vadd.f32 %v51, 0.5
    %v57 = vadd.f32 %v52, 0.5
    %v58 = vmul.f32 %v56, 0.125
    %v59 = vmul.f32 %v57, 0.125
    %v60 = vfloor.f32 %v58
    %v61 = vfloor.f32 %v59
    %v62 = vadd.f32 %v55, 0.5
    %v63 = vmul.f32 %v62, 0.125
    %v64 = vfloor.f32 %v63
    %vm65 = vcmp.eq.f32.partialorder %v60, %v64
    %vm66 = vcmp.eq.f32.partialorder %v61, %v64
    %v67 = vsel %vm65, 0.0, -1e+30
    %v68 = vsel %vm66, 0.0, -1e+30
    %v69 = vld [vmem:[%s9] sm:$0x1]
    %v70 = vld [vmem:[%s10] sm:$0x1]
    %vm71 = vcmask 261120
    %v72 = vsel %vm71, %v46, 0.0
    %73 = vadd.xlane.f32.xlu0 %v72
    %v74 = vpop.xlane.xlu0 %73
    %v75 = vsel %vm71, %v47, 0.0
    %76 = vadd.xlane.f32.xlu0 %v75
    %v77 = vpop.xlane.xlu0 %76
    %v78 = vrcp.pop 32.0
    %v79 = vmul.f32 %v74, %v78
    %v80 = vmul.f32 %v77, %v78
    %v81 = vsub.f32 %v46, %v79
    %v82 = vsub.f32 %v47, %v80
    %v83 = vmul.f32 %v81, %v81
    %v84 = vmul.f32 %v82, %v82
    %v85 = vsel %vm71, %v83, 0.0
    %86 = vadd.xlane.f32.xlu0 %v85
    %v87 = vpop.xlane.xlu0 %86
    %v88 = vsel %vm71, %v84, 0.0
    %89 = vadd.xlane.f32.xlu0 %v88
    %v90 = vpop.xlane.xlu0 %89
    %v91 = vmul.f32 %v87, %v78
    %v92 = vmul.f32 %v90, %v78
    %v93 = vadd.f32 %v91, 1e-05
    %v94 = vadd.f32 %v92, 1e-05
    %v95 = vrsqrt.pop %v93
    %v96 = vrsqrt.pop %v94
    %v97 = vmul.f32 %v81, %v95
    %v98 = vmul.f32 %v82, %v96
    %v100 = vlaneseq
    %v101 = vshrl.u32 %v100, 7
    %v102 = vsub.s32 0, %v101
    %v103 = vrot.slane %v69, %v102
    %v105 = vmul.f32 %v97, %v103
    %v106 = vmul.f32 %v98, %v103
    %v108 = vlaneseq
    %v109 = vshrl.u32 %v108, 7
    %v110 = vsub.s32 0, %v109
    %v111 = vrot.slane %v70, %v110
    %v113 = vadd.f32 %v105, %v111
    %v114 = vadd.f32 %v106, %v111
    %v115 = vpack.c.bf16 %v114, %v113
    %v116 = vld [vmem:[%s1] sm:$0xf]
    %v117 = vld [vmem:[%s1 + $0x4] sm:$0xf]
    %v118 = vld [vmem:[%s1 + $0x8] sm:$0xf]
    %v119 = vld [vmem:[%s1 + $0xc] sm:$0xf]
    %v120 = vld [vmem:[%s2] sm:$0x1]
    %v122 = vlaneseq
    %v123 = vshrl.u32 %v122, 7
    %v124 = vsub.s32 0, %v123
    %v125 = vrot.slane %v120, %v124
    %v131 = vunpack.c.l.b16 %v116
    %v132 = vunpack.c.l.b16 %v117
    %v133 = vunpack.c.l.b16 %v118
    %v134 = vunpack.c.l.b16 %v119
    %v135 = vpack.c.b16 %v132, %v131
    %v136 = vpack.c.b16 %v134, %v133
    %v140 = vsel %vm71, %v115, 0
    %142 = vmatprep.subr.bf16.mxu0 0
    %143 = vmatpush1.bf16.msra.mxu0 %v135
    %144 = vmatprep.subr.bf16.mxu0 0
    %145 = vmatpush1.bf16.msra.mxu0 %v136
    %146 = vmatprep.subr.bf16.mxu0 0
    %147 = vmatpush1.bf16.msra.mxu0 0
    %148 = vmatprep.subr.bf16.mxu0 0
    %149 = vmatpush1.bf16.msra.mxu0 0
    %150 = vmatprep.subr.bf16.mxu0 0
    %151 = vmatpush1.bf16.msra.mxu0 0
    %152 = vmatprep.subr.bf16.mxu0 0
    %153 = vmatpush1.bf16.msra.mxu0 0
    %154 = vmatprep.subr.bf16.mxu0 0
    %155 = vmatpush1.bf16.msra.mxu0 0
    %156 = vmatprep.subr.bf16.mxu0 0
    %157 = vmatpush1.bf16.msra.mxu0 0
    %158 = vmatprep.subr.bf16.mxu0 0
    %159 = vmatpush1.bf16.msra.mxu0 0
    %160 = vmatprep.subr.bf16.mxu0 0
    %161 = vmatpush1.bf16.msra.mxu0 0
    %162 = vmatprep.subr.bf16.mxu0 0
    %163 = vmatpush1.bf16.msra.mxu0 0
    %164 = vmatprep.subr.bf16.mxu0 0
    %165 = vmatpush1.bf16.msra.mxu0 0
    %166 = vmatprep.subr.bf16.mxu0 0
    %167 = vmatpush1.bf16.msra.mxu0 0
    %168 = vmatprep.subr.bf16.mxu0 0
    %169 = vmatpush1.bf16.msra.mxu0 0
    %170 = vmatprep.subr.bf16.mxu0 0
    %171 = vmatpush1.bf16.msra.mxu0 0
    %172 = vmatprep.subr.bf16.mxu0 0
    %173 = vmatpush1.bf16.msra.mxu0 0
    %174 = vmatprep.mubr.bf16.mxu0 0
    %175 = vmatmul.mubr.bf16.gmra.mrb[0].mxu0 %v140
    %v176 = vpop.f32.mrb[0].mxu0
    %v177 = vadd.f32 %v125, %v176
    %v178 = vpop.f32.mrb[0].mxu0
    %v179 = vpop.f32.mrb[0].mxu0
    %v180 = vadd.f32 %v125, %v179
    %v181 = vpop.f32.mrb[0].mxu0
    %182 = vdwg.mxu0
    %v183 = vpack.c.bf16 %v180, %v177
    %185 = vrot.lane.b32.xlu0 %v183, 96
    %v186 = vpop.permute.xlu0 %185
    %vm187 = vcmask 31744
    %v189 = vsel %vm187, %v183, 0
    %v192 = vsel %vm187, %v186, 0
    %194 = vmatprep.subr.bf16.mxu0 0
    %195 = vmatpush1.bf16.xpose.msra.mxu0 %v192
    %196 = vmatprep.subr.bf16.mxu0 0
    %197 = vmatpush1.bf16.xpose.msra.mxu0 0
    %198 = vmatprep.subr.bf16.mxu0 0
    %199 = vmatpush1.bf16.xpose.msra.mxu0 0
    %200 = vmatprep.subr.bf16.mxu0 0
    %201 = vmatpush1.bf16.xpose.msra.mxu0 0
    %202 = vmatprep.subr.bf16.mxu0 0
    %203 = vmatpush1.bf16.xpose.msra.mxu0 0
    %204 = vmatprep.subr.bf16.mxu0 0
    %205 = vmatpush1.bf16.xpose.msra.mxu0 0
    %206 = vmatprep.subr.bf16.mxu0 0
    %207 = vmatpush1.bf16.xpose.msra.mxu0 0
    %208 = vmatprep.subr.bf16.mxu0 0
    %209 = vmatpush1.bf16.xpose.msra.mxu0 0
    %210 = vmatprep.subr.bf16.mxu0 0
    %211 = vmatpush1.bf16.xpose.msra.mxu0 0
    %212 = vmatprep.subr.bf16.mxu0 0
    %213 = vmatpush1.bf16.xpose.msra.mxu0 0
    %214 = vmatprep.subr.bf16.mxu0 0
    %215 = vmatpush1.bf16.xpose.msra.mxu0 0
    %216 = vmatprep.subr.bf16.mxu0 0
    %217 = vmatpush1.bf16.xpose.msra.mxu0 0
    %218 = vmatprep.subr.bf16.mxu0 0
    %219 = vmatpush1.bf16.xpose.msra.mxu0 0
    %220 = vmatprep.subr.bf16.mxu0 0
    %221 = vmatpush1.bf16.xpose.msra.mxu0 0
    %222 = vmatprep.subr.bf16.mxu0 0
    %223 = vmatpush1.bf16.xpose.msra.mxu0 0
    %224 = vmatprep.subr.bf16.mxu0 0
    %225 = vmatpush1.bf16.xpose.msra.mxu0 0
    %226 = vmatprep.mubr.bf16.mxu0 0
    %227 = vmatmul.mubr.bf16.gmra.mrb[0].mxu0 %v189
    %v228 = vpop.f32.mrb[0].mxu0
    %v229 = vadd.f32 %v67, %v228
    %v230 = vpop.f32.mrb[0].mxu0
    %v231 = vpop.f32.mrb[0].mxu0
    %v232 = vadd.f32 %v68, %v231
    %v233 = vpop.f32.mrb[0].mxu0
    %234 = vdwg.mxu0
    %vm235 = vcmask 130048
    %v236 = vsel %vm235, %v229, -inf
    %237 = vmax.xlane.f32.xlu0 %v236
    %v238 = vpop.xlane.xlu0 %237
    %v239 = vsel %vm235, %v232, -inf
    %240 = vmax.xlane.f32.xlu0 %v239
    %v241 = vpop.xlane.xlu0 %240
    %v242 = vsub.f32 %v229, %v238
    %v243 = vsub.f32 %v232, %v241
    %v244 = vmul.f32 %v242, 1.442695
    %v245 = vpow.pop %v244
    %v246 = vmul.f32 %v243, 1.442695
    %v247 = vpow.pop %v246
    %v248 = vsel %vm235, %v245, 0.0
    %249 = vadd.xlane.f32.xlu0 %v248
    %v250 = vpop.xlane.xlu0 %249
    %v251 = vsel %vm235, %v247, 0.0
    %252 = vadd.xlane.f32.xlu0 %v251
    %v253 = vpop.xlane.xlu0 %252
    %v254 = vrcp.pop %v250
    %v255 = vrcp.pop %v253
    %v256 = vmul.f32 %v245, %v254
    %v257 = vmul.f32 %v247, %v255
    %v258 = vpack.c.bf16 %v257, %v256
    %259 = vrot.lane.b32.xlu0 %v183, 64
    %v260 = vpop.permute.xlu0 %259
    %v263 = vsel %vm235, %v258, 0
    %265 = vmatprep.subr.bf16.mxu0 0
    %266 = vmatpush1.bf16.msra.mxu0 %v260
    %267 = vmatprep.subr.bf16.mxu0 0
    %268 = vmatpush1.bf16.msra.mxu0 0
    %269 = vmatprep.subr.bf16.mxu0 0
    %270 = vmatpush1.bf16.msra.mxu0 0
    %271 = vmatprep.subr.bf16.mxu0 0
    %272 = vmatpush1.bf16.msra.mxu0 0
    %273 = vmatprep.subr.bf16.mxu0 0
    %274 = vmatpush1.bf16.msra.mxu0 0
    %275 = vmatprep.subr.bf16.mxu0 0
    %276 = vmatpush1.bf16.msra.mxu0 0
    %277 = vmatprep.subr.bf16.mxu0 0
    %278 = vmatpush1.bf16.msra.mxu0 0
    %279 = vmatprep.subr.bf16.mxu0 0
    %280 = vmatpush1.bf16.msra.mxu0 0
    %281 = vmatprep.subr.bf16.mxu0 0
    %282 = vmatpush1.bf16.msra.mxu0 0
    %283 = vmatprep.subr.bf16.mxu0 0
    %284 = vmatpush1.bf16.msra.mxu0 0
    %285 = vmatprep.subr.bf16.mxu0 0
    %286 = vmatpush1.bf16.msra.mxu0 0
    %287 = vmatprep.subr.bf16.mxu0 0
    %288 = vmatpush1.bf16.msra.mxu0 0
    %289 = vmatprep.subr.bf16.mxu0 0
    %290 = vmatpush1.bf16.msra.mxu0 0
    %291 = vmatprep.subr.bf16.mxu0 0
    %292 = vmatpush1.bf16.msra.mxu0 0
    %293 = vmatprep.subr.bf16.mxu0 0
    %294 = vmatpush1.bf16.msra.mxu0 0
    %295 = vmatprep.subr.bf16.mxu0 0
    %296 = vmatpush1.bf16.msra.mxu0 0
    %297 = vmatprep.mubr.bf16.mxu0 0
    %298 = vmatmul.mubr.bf16.gmra.mrb[0].mxu0 %v263
    %v299 = vpop.f32.mrb[0].mxu0
    %v300 = vadd.f32 0.0, %v299
    %v301 = vpop.f32.mrb[0].mxu0
    %v302 = vpop.f32.mrb[0].mxu0
    %v303 = vadd.f32 0.0, %v302
    %v304 = vpop.f32.mrb[0].mxu0
    %305 = vdwg.mxu0
    %306 = vst.msk [vmem:[#allocation2] sm:$0xff] %vm187, %v300
    %307 = vst.msk [vmem:[#allocation2 + $0x8] sm:$0xff] %vm187, %v303
    %308 = vrot.lane.b32.xlu0 %v183, 124
    %v309 = vpop.permute.xlu0 %308
    %310 = vrot.lane.b32.xlu0 %v183, 92
    %v311 = vpop.permute.xlu0 %310
    %v313 = vsel %vm187, %v309, 0
    %v316 = vsel %vm187, %v311, 0
    %318 = vmatprep.subr.bf16.mxu0 0
    %319 = vmatpush1.bf16.xpose.msra.mxu0 %v316
    %320 = vmatprep.subr.bf16.mxu0 0
    %321 = vmatpush1.bf16.xpose.msra.mxu0 0
    %322 = vmatprep.subr.bf16.mxu0 0
    %323 = vmatpush1.bf16.xpose.msra.mxu0 0
    %324 = vmatprep.subr.bf16.mxu0 0
    %325 = vmatpush1.bf16.xpose.msra.mxu0 0
    %326 = vmatprep.subr.bf16.mxu0 0
    %327 = vmatpush1.bf16.xpose.msra.mxu0 0
    %328 = vmatprep.subr.bf16.mxu0 0
    %329 = vmatpush1.bf16.xpose.msra.mxu0 0
    %330 = vmatprep.subr.bf16.mxu0 0
    %331 = vmatpush1.bf16.xpose.msra.mxu0 0
    %332 = vmatprep.subr.bf16.mxu0 0
    %333 = vmatpush1.bf16.xpose.msra.mxu0 0
    %334 = vmatprep.subr.bf16.mxu0 0
    %335 = vmatpush1.bf16.xpose.msra.mxu0 0
    %336 = vmatprep.subr.bf16.mxu0 0
    %337 = vmatpush1.bf16.xpose.msra.mxu0 0
    %338 = vmatprep.subr.bf16.mxu0 0
    %339 = vmatpush1.bf16.xpose.msra.mxu0 0
    %340 = vmatprep.subr.bf16.mxu0 0
    %341 = vmatpush1.bf16.xpose.msra.mxu0 0
    %342 = vmatprep.subr.bf16.mxu0 0
    %343 = vmatpush1.bf16.xpose.msra.mxu0 0
    %344 = vmatprep.subr.bf16.mxu0 0
    %345 = vmatpush1.bf16.xpose.msra.mxu0 0
    %346 = vmatprep.subr.bf16.mxu0 0
    %347 = vmatpush1.bf16.xpose.msra.mxu0 0
    %348 = vmatprep.subr.bf16.mxu0 0
    %349 = vmatpush1.bf16.xpose.msra.mxu0 0
    %350 = vmatprep.mubr.bf16.mxu0 0
    %351 = vmatmul.mubr.bf16.gmra.mrb[0].mxu0 %v313
    %v352 = vpop.f32.mrb[0].mxu0
    %v353 = vadd.f32 %v67, %v352
    %v354 = vpop.f32.mrb[0].mxu0
    %v355 = vpop.f32.mrb[0].mxu0
    %v356 = vadd.f32 %v68, %v355
    %v357 = vpop.f32.mrb[0].mxu0
    %358 = vdwg.mxu0
    %v359 = vsel %vm235, %v353, -inf
    %360 = vmax.xlane.f32.xlu0 %v359
    %v361 = vpop.xlane.xlu0 %360
    %v362 = vsel %vm235, %v356, -inf
    %363 = vmax.xlane.f32.xlu0 %v362
    %v364 = vpop.xlane.xlu0 %363
    %v365 = vsub.f32 %v353, %v361
    %v366 = vsub.f32 %v356, %v364
    %v367 = vmul.f32 %v365, 1.442695
    %v368 = vpow.pop %v367
    %v369 = vmul.f32 %v366, 1.442695
    %v370 = vpow.pop %v369
    %v371 = vsel %vm235, %v368, 0.0
    %372 = vadd.xlane.f32.xlu0 %v371
    %v373 = vpop.xlane.xlu0 %372
    %v374 = vsel %vm235, %v370, 0.0
    %375 = vadd.xlane.f32.xlu0 %v374
    %v376 = vpop.xlane.xlu0 %375
    %v377 = vrcp.pop %v373
    %v378 = vrcp.pop %v376
    %v379 = vmul.f32 %v368, %v377
    %v380 = vmul.f32 %v370, %v378
    %v381 = vpack.c.bf16 %v380, %v379
    %382 = vrot.lane.b32.xlu0 %v183, 60
    %v383 = vpop.permute.xlu0 %382
    %v386 = vsel %vm235, %v381, 0
    %388 = vmatprep.subr.bf16.mxu0 0
    %389 = vmatpush1.bf16.msra.mxu0 %v383
    %390 = vmatprep.subr.bf16.mxu0 0
    %391 = vmatpush1.bf16.msra.mxu0 0
    %392 = vmatprep.subr.bf16.mxu0 0
    %393 = vmatpush1.bf16.msra.mxu0 0
    %394 = vmatprep.subr.bf16.mxu0 0
    %395 = vmatpush1.bf16.msra.mxu0 0
    %396 = vmatprep.subr.bf16.mxu0 0
    %397 = vmatpush1.bf16.msra.mxu0 0
    %398 = vmatprep.subr.bf16.mxu0 0
    %399 = vmatpush1.bf16.msra.mxu0 0
    %400 = vmatprep.subr.bf16.mxu0 0
    %401 = vmatpush1.bf16.msra.mxu0 0
    %402 = vmatprep.subr.bf16.mxu0 0
    %403 = vmatpush1.bf16.msra.mxu0 0
    %404 = vmatprep.subr.bf16.mxu0 0
    %405 = vmatpush1.bf16.msra.mxu0 0
    %406 = vmatprep.subr.bf16.mxu0 0
    %407 = vmatpush1.bf16.msra.mxu0 0
    %408 = vmatprep.subr.bf16.mxu0 0
    %409 = vmatpush1.bf16.msra.mxu0 0
    %410 = vmatprep.subr.bf16.mxu0 0
    %411 = vmatpush1.bf16.msra.mxu0 0
    %412 = vmatprep.subr.bf16.mxu0 0
    %413 = vmatpush1.bf16.msra.mxu0 0
    %414 = vmatprep.subr.bf16.mxu0 0
    %415 = vmatpush1.bf16.msra.mxu0 0
    %416 = vmatprep.subr.bf16.mxu0 0
    %417 = vmatpush1.bf16.msra.mxu0 0
    %418 = vmatprep.subr.bf16.mxu0 0
    %419 = vmatpush1.bf16.msra.mxu0 0
    %420 = vmatprep.mubr.bf16.mxu0 0
    %421 = vmatmul.mubr.bf16.gmra.mrb[0].mxu0 %v386
    %v422 = vpop.f32.mrb[0].mxu0
    %v423 = vadd.f32 0.0, %v422
    %v424 = vpop.f32.mrb[0].mxu0
    %v425 = vpop.f32.mrb[0].mxu0
    %v426 = vadd.f32 0.0, %v425
    %v427 = vpop.f32.mrb[0].mxu0
    %428 = vdwg.mxu0
    %431 = vrot.lane.b32.xlu0 %v423, 4
    %v432 = vpop.permute.xlu0 %431
    %433 = vrot.lane.b32.xlu0 %v426, 4
    %v434 = vpop.permute.xlu0 %433
    %vm437 = vcmask 64544
    %438 = vst.msk [vmem:[#allocation2] sm:$0xff] %vm437, %v432
    %439 = vst.msk [vmem:[#allocation2 + $0x8] sm:$0xff] %vm437, %v434
    %440 = vrot.lane.b32.xlu0 %v183, 120
    %v441 = vpop.permute.xlu0 %440
    %442 = vrot.lane.b32.xlu0 %v183, 88
    %v443 = vpop.permute.xlu0 %442
    %v445 = vsel %vm187, %v441, 0
    %v448 = vsel %vm187, %v443, 0
    %450 = vmatprep.subr.bf16.mxu0 0
    %451 = vmatpush1.bf16.xpose.msra.mxu0 %v448
    %452 = vmatprep.subr.bf16.mxu0 0
    %453 = vmatpush1.bf16.xpose.msra.mxu0 0
    %454 = vmatprep.subr.bf16.mxu0 0
    %455 = vmatpush1.bf16.xpose.msra.mxu0 0
    %456 = vmatprep.subr.bf16.mxu0 0
    %457 = vmatpush1.bf16.xpose.msra.mxu0 0
    %458 = vmatprep.subr.bf16.mxu0 0
    %459 = vmatpush1.bf16.xpose.msra.mxu0 0
    %460 = vmatprep.subr.bf16.mxu0 0
    %461 = vmatpush1.bf16.xpose.msra.mxu0 0
    %462 = vmatprep.subr.bf16.mxu0 0
    %463 = vmatpush1.bf16.xpose.msra.mxu0 0
    %464 = vmatprep.subr.bf16.mxu0 0
    %465 = vmatpush1.bf16.xpose.msra.mxu0 0
    %466 = vmatprep.subr.bf16.mxu0 0
    %467 = vmatpush1.bf16.xpose.msra.mxu0 0
    %468 = vmatprep.subr.bf16.mxu0 0
    %469 = vmatpush1.bf16.xpose.msra.mxu0 0
    %470 = vmatprep.subr.bf16.mxu0 0
    %471 = vmatpush1.bf16.xpose.msra.mxu0 0
    %472 = vmatprep.subr.bf16.mxu0 0
    %473 = vmatpush1.bf16.xpose.msra.mxu0 0
    %474 = vmatprep.subr.bf16.mxu0 0
    %475 = vmatpush1.bf16.xpose.msra.mxu0 0
    %476 = vmatprep.subr.bf16.mxu0 0
    %477 = vmatpush1.bf16.xpose.msra.mxu0 0
    %478 = vmatprep.subr.bf16.mxu0 0
    %479 = vmatpush1.bf16.xpose.msra.mxu0 0
    %480 = vmatprep.subr.bf16.mxu0 0
    %481 = vmatpush1.bf16.xpose.msra.mxu0 0
    %482 = vmatprep.mubr.bf16.mxu0 0
    %483 = vmatmul.mubr.bf16.gmra.mrb[0].mxu0 %v445
    %v484 = vpop.f32.mrb[0].mxu0
    %v485 = vadd.f32 %v67, %v484
    %v486 = vpop.f32.mrb[0].mxu0
    %v487 = vpop.f32.mrb[0].mxu0
    %v488 = vadd.f32 %v68, %v487
    %v489 = vpop.f32.mrb[0].mxu0
    %490 = vdwg.mxu0
    %v491 = vsel %vm235, %v485, -inf
    %492 = vmax.xlane.f32.xlu0 %v491
    %v493 = vpop.xlane.xlu0 %492
    %v494 = vsel %vm235, %v488, -inf
    %495 = vmax.xlane.f32.xlu0 %v494
    %v496 = vpop.xlane.xlu0 %495
    %v497 = vsub.f32 %v485, %v493
    %v498 = vsub.f32 %v488, %v496
    %v499 = vmul.f32 %v497, 1.442695
    %v500 = vpow.pop %v499
    %v501 = vmul.f32 %v498, 1.442695
    %v502 = vpow.pop %v501
    %v503 = vsel %vm235, %v500, 0.0
    %504 = vadd.xlane.f32.xlu0 %v503
    %v505 = vpop.xlane.xlu0 %504
    %v506 = vsel %vm235, %v502, 0.0
    %507 = vadd.xlane.f32.xlu0 %v506
    %v508 = vpop.xlane.xlu0 %507
    %v509 = vrcp.pop %v505
    %v510 = vrcp.pop %v508
    %v511 = vmul.f32 %v500, %v509
    %v512 = vmul.f32 %v502, %v510
    %v513 = vpack.c.bf16 %v512, %v511
    %514 = vrot.lane.b32.xlu0 %v183, 56
    %v515 = vpop.permute.xlu0 %514
    %v518 = vsel %vm235, %v513, 0
    %520 = vmatprep.subr.bf16.mxu0 0
    %521 = vmatpush1.bf16.msra.mxu0 %v515
    %522 = vmatprep.subr.bf16.mxu0 0
    %523 = vmatpush1.bf16.msra.mxu0 0
    %524 = vmatprep.subr.bf16.mxu0 0
    %525 = vmatpush1.bf16.msra.mxu0 0
    %526 = vmatprep.subr.bf16.mxu0 0
    %527 = vmatpush1.bf16.msra.mxu0 0
    %528 = vmatprep.subr.bf16.mxu0 0
    %529 = vmatpush1.bf16.msra.mxu0 0
    %530 = vmatprep.subr.bf16.mxu0 0
    %531 = vmatpush1.bf16.msra.mxu0 0
    %532 = vmatprep.subr.bf16.mxu0 0
    %533 = vmatpush1.bf16.msra.mxu0 0
    %534 = vmatprep.subr.bf16.mxu0 0
    %535 = vmatpush1.bf16.msra.mxu0 0
    %536 = vmatprep.subr.bf16.mxu0 0
    %537 = vmatpush1.bf16.msra.mxu0 0
    %538 = vmatprep.subr.bf16.mxu0 0
    %539 = vmatpush1.bf16.msra.mxu0 0
    %540 = vmatprep.subr.bf16.mxu0 0
    %541 = vmatpush1.bf16.msra.mxu0 0
    %542 = vmatprep.subr.bf16.mxu0 0
    %543 = vmatpush1.bf16.msra.mxu0 0
    %544 = vmatprep.subr.bf16.mxu0 0
    %545 = vmatpush1.bf16.msra.mxu0 0
    %546 = vmatprep.subr.bf16.mxu0 0
    %547 = vmatpush1.bf16.msra.mxu0 0
    %548 = vmatprep.subr.bf16.mxu0 0
    %549 = vmatpush1.bf16.msra.mxu0 0
    %550 = vmatprep.subr.bf16.mxu0 0
    %551 = vmatpush1.bf16.msra.mxu0 0
    %552 = vmatprep.mubr.bf16.mxu0 0
    %553 = vmatmul.mubr.bf16.gmra.mrb[0].mxu0 %v518
    %v554 = vpop.f32.mrb[0].mxu0
    %v555 = vadd.f32 0.0, %v554
    %v556 = vpop.f32.mrb[0].mxu0
    %v557 = vpop.f32.mrb[0].mxu0
    %v558 = vadd.f32 0.0, %v557
    %v559 = vpop.f32.mrb[0].mxu0
    %560 = vdwg.mxu0
    %563 = vrot.lane.b32.xlu0 %v555, 8
    %v564 = vpop.permute.xlu0 %563
    %565 = vrot.lane.b32.xlu0 %v558, 8
    %v566 = vpop.permute.xlu0 %565
    %vm569 = vcmask 97344
    %570 = vst.msk [vmem:[#allocation2] sm:$0xff] %vm569, %v564
    %571 = vst.msk [vmem:[#allocation2 + $0x8] sm:$0xff] %vm569, %v566
    %572 = vrot.lane.b32.xlu0 %v183, 116
    %v573 = vpop.permute.xlu0 %572
    %574 = vrot.lane.b32.xlu0 %v183, 84
    %v575 = vpop.permute.xlu0 %574
    %v577 = vsel %vm187, %v573, 0
    %v580 = vsel %vm187, %v575, 0
    %582 = vmatprep.subr.bf16.mxu0 0
    %583 = vmatpush1.bf16.xpose.msra.mxu0 %v580
    %584 = vmatprep.subr.bf16.mxu0 0
    %585 = vmatpush1.bf16.xpose.msra.mxu0 0
    %586 = vmatprep.subr.bf16.mxu0 0
    %587 = vmatpush1.bf16.xpose.msra.mxu0 0
    %588 = vmatprep.subr.bf16.mxu0 0
    %589 = vmatpush1.bf16.xpose.msra.mxu0 0
    %590 = vmatprep.subr.bf16.mxu0 0
    %591 = vmatpush1.bf16.xpose.msra.mxu0 0
    %592 = vmatprep.subr.bf16.mxu0 0
    %593 = vmatpush1.bf16.xpose.msra.mxu0 0
    %594 = vmatprep.subr.bf16.mxu0 0
    %595 = vmatpush1.bf16.xpose.msra.mxu0 0
    %596 = vmatprep.subr.bf16.mxu0 0
    %597 = vmatpush1.bf16.xpose.msra.mxu0 0
    %598 = vmatprep.subr.bf16.mxu0 0
    %599 = vmatpush1.bf16.xpose.msra.mxu0 0
    %600 = vmatprep.subr.bf16.mxu0 0
    %601 = vmatpush1.bf16.xpose.msra.mxu0 0
    %602 = vmatprep.subr.bf16.mxu0 0
    %603 = vmatpush1.bf16.xpose.msra.mxu0 0
    %604 = vmatprep.subr.bf16.mxu0 0
    %605 = vmatpush1.bf16.xpose.msra.mxu0 0
    %606 = vmatprep.subr.bf16.mxu0 0
    %607 = vmatpush1.bf16.xpose.msra.mxu0 0
    %608 = vmatprep.subr.bf16.mxu0 0
    %609 = vmatpush1.bf16.xpose.msra.mxu0 0
    %610 = vmatprep.subr.bf16.mxu0 0
    %611 = vmatpush1.bf16.xpose.msra.mxu0 0
    %612 = vmatprep.subr.bf16.mxu0 0
    %613 = vmatpush1.bf16.xpose.msra.mxu0 0
    %614 = vmatprep.mubr.bf16.mxu0 0
    %615 = vmatmul.mubr.bf16.gmra.mrb[0].mxu0 %v577
    %v616 = vpop.f32.mrb[0].mxu0
    %v617 = vadd.f32 %v67, %v616
    %v618 = vpop.f32.mrb[0].mxu0
    %v619 = vpop.f32.mrb[0].mxu0
    %v620 = vadd.f32 %v68, %v619
    %v621 = vpop.f32.mrb[0].mxu0
    %622 = vdwg.mxu0
    %v623 = vsel %vm235, %v617, -inf
    %624 = vmax.xlane.f32.xlu0 %v623
    %v625 = vpop.xlane.xlu0 %624
    %v626 = vsel %vm235, %v620, -inf
    %627 = vmax.xlane.f32.xlu0 %v626
    %v628 = vpop.xlane.xlu0 %627
    %v629 = vsub.f32 %v617, %v625
    %v630 = vsub.f32 %v620, %v628
    %v631 = vmul.f32 %v629, 1.442695
    %v632 = vpow.pop %v631
    %v633 = vmul.f32 %v630, 1.442695
    %v634 = vpow.pop %v633
    %v635 = vsel %vm235, %v632, 0.0
    %636 = vadd.xlane.f32.xlu0 %v635
    %v637 = vpop.xlane.xlu0 %636
    %v638 = vsel %vm235, %v634, 0.0
    %639 = vadd.xlane.f32.xlu0 %v638
    %v640 = vpop.xlane.xlu0 %639
    %v641 = vrcp.pop %v637
    %v642 = vrcp.pop %v640
    %v643 = vmul.f32 %v632, %v641
    %v644 = vmul.f32 %v634, %v642
    %v645 = vpack.c.bf16 %v644, %v643
    %646 = vrot.lane.b32.xlu0 %v183, 52
    %v647 = vpop.permute.xlu0 %646
    %v650 = vsel %vm235, %v645, 0
    %652 = vmatprep.subr.bf16.mxu0 0
    %653 = vmatpush1.bf16.msra.mxu0 %v647
    %654 = vmatprep.subr.bf16.mxu0 0
    %655 = vmatpush1.bf16.msra.mxu0 0
    %656 = vmatprep.subr.bf16.mxu0 0
    %657 = vmatpush1.bf16.msra.mxu0 0
    %658 = vmatprep.subr.bf16.mxu0 0
    %659 = vmatpush1.bf16.msra.mxu0 0
    %660 = vmatprep.subr.bf16.mxu0 0
    %661 = vmatpush1.bf16.msra.mxu0 0
    %662 = vmatprep.subr.bf16.mxu0 0
    %663 = vmatpush1.bf16.msra.mxu0 0
    %664 = vmatprep.subr.bf16.mxu0 0
    %665 = vmatpush1.bf16.msra.mxu0 0
    %666 = vmatprep.subr.bf16.mxu0 0
    %667 = vmatpush1.bf16.msra.mxu0 0
    %668 = vmatprep.subr.bf16.mxu0 0
    %669 = vmatpush1.bf16.msra.mxu0 0
    %670 = vmatprep.subr.bf16.mxu0 0
    %671 = vmatpush1.bf16.msra.mxu0 0
    %672 = vmatprep.subr.bf16.mxu0 0
    %673 = vmatpush1.bf16.msra.mxu0 0
    %674 = vmatprep.subr.bf16.mxu0 0
    %675 = vmatpush1.bf16.msra.mxu0 0
    %676 = vmatprep.subr.bf16.mxu0 0
    %677 = vmatpush1.bf16.msra.mxu0 0
    %678 = vmatprep.subr.bf16.mxu0 0
    %679 = vmatpush1.bf16.msra.mxu0 0
    %680 = vmatprep.subr.bf16.mxu0 0
    %681 = vmatpush1.bf16.msra.mxu0 0
    %682 = vmatprep.subr.bf16.mxu0 0
    %683 = vmatpush1.bf16.msra.mxu0 0
    %684 = vmatprep.mubr.bf16.mxu0 0
    %685 = vmatmul.mubr.bf16.gmra.mrb[0].mxu0 %v650
    %v686 = vpop.f32.mrb[0].mxu0
    %v687 = vadd.f32 0.0, %v686
    %v688 = vpop.f32.mrb[0].mxu0
    %v689 = vpop.f32.mrb[0].mxu0
    %v690 = vadd.f32 0.0, %v689
    %v691 = vpop.f32.mrb[0].mxu0
    %692 = vdwg.mxu0
    %695 = vrot.lane.b32.xlu0 %v687, 12
    %v696 = vpop.permute.xlu0 %695
    %697 = vrot.lane.b32.xlu0 %v690, 12
    %v698 = vpop.permute.xlu0 %697
    %vm701 = vcmask 130144
    %702 = vst.msk [vmem:[#allocation2] sm:$0xff] %vm701, %v696
    %703 = vst.msk [vmem:[#allocation2 + $0x8] sm:$0xff] %vm701, %v698
    %704 = vrot.lane.b32.xlu0 %v183, 112
    %v705 = vpop.permute.xlu0 %704
    %706 = vrot.lane.b32.xlu0 %v183, 80
    %v707 = vpop.permute.xlu0 %706
    %v709 = vsel %vm187, %v705, 0
    %v712 = vsel %vm187, %v707, 0
    %714 = vmatprep.subr.bf16.mxu0 0
    %715 = vmatpush1.bf16.xpose.msra.mxu0 %v712
    %716 = vmatprep.subr.bf16.mxu0 0
    %717 = vmatpush1.bf16.xpose.msra.mxu0 0
    %718 = vmatprep.subr.bf16.mxu0 0
    %719 = vmatpush1.bf16.xpose.msra.mxu0 0
    %720 = vmatprep.subr.bf16.mxu0 0
    %721 = vmatpush1.bf16.xpose.msra.mxu0 0
    %722 = vmatprep.subr.bf16.mxu0 0
    %723 = vmatpush1.bf16.xpose.msra.mxu0 0
    %724 = vmatprep.subr.bf16.mxu0 0
    %725 = vmatpush1.bf16.xpose.msra.mxu0 0
    %726 = vmatprep.subr.bf16.mxu0 0
    %727 = vmatpush1.bf16.xpose.msra.mxu0 0
    %728 = vmatprep.subr.bf16.mxu0 0
    %729 = vmatpush1.bf16.xpose.msra.mxu0 0
    %730 = vmatprep.subr.bf16.mxu0 0
    %731 = vmatpush1.bf16.xpose.msra.mxu0 0
    %732 = vmatprep.subr.bf16.mxu0 0
    %733 = vmatpush1.bf16.xpose.msra.mxu0 0
    %734 = vmatprep.subr.bf16.mxu0 0
    %735 = vmatpush1.bf16.xpose.msra.mxu0 0
    %736 = vmatprep.subr.bf16.mxu0 0
    %737 = vmatpush1.bf16.xpose.msra.mxu0 0
    %738 = vmatprep.subr.bf16.mxu0 0
    %739 = vmatpush1.bf16.xpose.msra.mxu0 0
    %740 = vmatprep.subr.bf16.mxu0 0
    %741 = vmatpush1.bf16.xpose.msra.mxu0 0
    %742 = vmatprep.subr.bf16.mxu0 0
    %743 = vmatpush1.bf16.xpose.msra.mxu0 0
    %744 = vmatprep.subr.bf16.mxu0 0
    %745 = vmatpush1.bf16.xpose.msra.mxu0 0
    %746 = vmatprep.mubr.bf16.mxu0 0
    %747 = vmatmul.mubr.bf16.gmra.mrb[0].mxu0 %v709
    %v748 = vpop.f32.mrb[0].mxu0
    %v749 = vadd.f32 %v67, %v748
    %v750 = vpop.f32.mrb[0].mxu0
    %v751 = vpop.f32.mrb[0].mxu0
    %v752 = vadd.f32 %v68, %v751
    %v753 = vpop.f32.mrb[0].mxu0
    %754 = vdwg.mxu0
    %v755 = vsel %vm235, %v749, -inf
    %756 = vmax.xlane.f32.xlu0 %v755
    %v757 = vpop.xlane.xlu0 %756
    %v758 = vsel %vm235, %v752, -inf
    %759 = vmax.xlane.f32.xlu0 %v758
    %v760 = vpop.xlane.xlu0 %759
    %v761 = vsub.f32 %v749, %v757
    %v762 = vsub.f32 %v752, %v760
    %v763 = vmul.f32 %v761, 1.442695
    %v764 = vpow.pop %v763
    %v765 = vmul.f32 %v762, 1.442695
    %v766 = vpow.pop %v765
    %v767 = vsel %vm235, %v764, 0.0
    %768 = vadd.xlane.f32.xlu0 %v767
    %v769 = vpop.xlane.xlu0 %768
    %v770 = vsel %vm235, %v766, 0.0
    %771 = vadd.xlane.f32.xlu0 %v770
    %v772 = vpop.xlane.xlu0 %771
    %v773 = vrcp.pop %v769
    %v774 = vrcp.pop %v772
    %v775 = vmul.f32 %v764, %v773
    %v776 = vmul.f32 %v766, %v774
    %v777 = vpack.c.bf16 %v776, %v775
    %778 = vrot.lane.b32.xlu0 %v183, 48
    %v779 = vpop.permute.xlu0 %778
    %v782 = vsel %vm235, %v777, 0
    %784 = vmatprep.subr.bf16.mxu0 0
    %785 = vmatpush1.bf16.msra.mxu0 %v779
    %786 = vmatprep.subr.bf16.mxu0 0
    %787 = vmatpush1.bf16.msra.mxu0 0
    %788 = vmatprep.subr.bf16.mxu0 0
    %789 = vmatpush1.bf16.msra.mxu0 0
    %790 = vmatprep.subr.bf16.mxu0 0
    %791 = vmatpush1.bf16.msra.mxu0 0
    %792 = vmatprep.subr.bf16.mxu0 0
    %793 = vmatpush1.bf16.msra.mxu0 0
    %794 = vmatprep.subr.bf16.mxu0 0
    %795 = vmatpush1.bf16.msra.mxu0 0
    %796 = vmatprep.subr.bf16.mxu0 0
    %797 = vmatpush1.bf16.msra.mxu0 0
    %798 = vmatprep.subr.bf16.mxu0 0
    %799 = vmatpush1.bf16.msra.mxu0 0
    %800 = vmatprep.subr.bf16.mxu0 0
    %801 = vmatpush1.bf16.msra.mxu0 0
    %802 = vmatprep.subr.bf16.mxu0 0
    %803 = vmatpush1.bf16.msra.mxu0 0
    %804 = vmatprep.subr.bf16.mxu0 0
    %805 = vmatpush1.bf16.msra.mxu0 0
    %806 = vmatprep.subr.bf16.mxu0 0
    %807 = vmatpush1.bf16.msra.mxu0 0
    %808 = vmatprep.subr.bf16.mxu0 0
    %809 = vmatpush1.bf16.msra.mxu0 0
    %810 = vmatprep.subr.bf16.mxu0 0
    %811 = vmatpush1.bf16.msra.mxu0 0
    %812 = vmatprep.subr.bf16.mxu0 0
    %813 = vmatpush1.bf16.msra.mxu0 0
    %814 = vmatprep.subr.bf16.mxu0 0
    %815 = vmatpush1.bf16.msra.mxu0 0
    %816 = vmatprep.mubr.bf16.mxu0 0
    %817 = vmatmul.mubr.bf16.gmra.mrb[0].mxu0 %v782
    %v818 = vpop.f32.mrb[0].mxu0
    %v819 = vadd.f32 0.0, %v818
    %v820 = vpop.f32.mrb[0].mxu0
    %v821 = vpop.f32.mrb[0].mxu0
    %v822 = vadd.f32 0.0, %v821
    %v823 = vpop.f32.mrb[0].mxu0
    %824 = vdwg.mxu0
    %827 = vrot.lane.b32.xlu0 %v819, 16
    %v828 = vpop.permute.xlu0 %827
    %829 = vrot.lane.b32.xlu0 %v822, 16
    %v830 = vpop.permute.xlu0 %829
    %vm833 = vcmask 162944
    %834 = vst.msk [vmem:[#allocation2] sm:$0xff] %vm833, %v828
    %835 = vst.msk [vmem:[#allocation2 + $0x8] sm:$0xff] %vm833, %v830
    %836 = vrot.lane.b32.xlu0 %v183, 108
    %v837 = vpop.permute.xlu0 %836
    %838 = vrot.lane.b32.xlu0 %v183, 76
    %v839 = vpop.permute.xlu0 %838
    %v841 = vsel %vm187, %v837, 0
    %v844 = vsel %vm187, %v839, 0
    %846 = vmatprep.subr.bf16.mxu0 0
    %847 = vmatpush1.bf16.xpose.msra.mxu0 %v844
    %848 = vmatprep.subr.bf16.mxu0 0
    %849 = vmatpush1.bf16.xpose.msra.mxu0 0
    %850 = vmatprep.subr.bf16.mxu0 0
    %851 = vmatpush1.bf16.xpose.msra.mxu0 0
    %852 = vmatprep.subr.bf16.mxu0 0
    %853 = vmatpush1.bf16.xpose.msra.mxu0 0
    %854 = vmatprep.subr.bf16.mxu0 0
    %855 = vmatpush1.bf16.xpose.msra.mxu0 0
    %856 = vmatprep.subr.bf16.mxu0 0
    %857 = vmatpush1.bf16.xpose.msra.mxu0 0
    %858 = vmatprep.subr.bf16.mxu0 0
    %859 = vmatpush1.bf16.xpose.msra.mxu0 0
    %860 = vmatprep.subr.bf16.mxu0 0
    %861 = vmatpush1.bf16.xpose.msra.mxu0 0
    %862 = vmatprep.subr.bf16.mxu0 0
    %863 = vmatpush1.bf16.xpose.msra.mxu0 0
    %864 = vmatprep.subr.bf16.mxu0 0
    %865 = vmatpush1.bf16.xpose.msra.mxu0 0
    %866 = vmatprep.subr.bf16.mxu0 0
    %867 = vmatpush1.bf16.xpose.msra.mxu0 0
    %868 = vmatprep.subr.bf16.mxu0 0
    %869 = vmatpush1.bf16.xpose.msra.mxu0 0
    %870 = vmatprep.subr.bf16.mxu0 0
    %871 = vmatpush1.bf16.xpose.msra.mxu0 0
    %872 = vmatprep.subr.bf16.mxu0 0
    %873 = vmatpush1.bf16.xpose.msra.mxu0 0
    %874 = vmatprep.subr.bf16.mxu0 0
    %875 = vmatpush1.bf16.xpose.msra.mxu0 0
    %876 = vmatprep.subr.bf16.mxu0 0
    %877 = vmatpush1.bf16.xpose.msra.mxu0 0
    %878 = vmatprep.mubr.bf16.mxu0 0
    %879 = vmatmul.mubr.bf16.gmra.mrb[0].mxu0 %v841
    %v880 = vpop.f32.mrb[0].mxu0
    %v881 = vadd.f32 %v67, %v880
    %v882 = vpop.f32.mrb[0].mxu0
    %v883 = vpop.f32.mrb[0].mxu0
    %v884 = vadd.f32 %v68, %v883
    %v885 = vpop.f32.mrb[0].mxu0
    %886 = vdwg.mxu0
    %v887 = vsel %vm235, %v881, -inf
    %888 = vmax.xlane.f32.xlu0 %v887
    %v889 = vpop.xlane.xlu0 %888
    %v890 = vsel %vm235, %v884, -inf
    %891 = vmax.xlane.f32.xlu0 %v890
    %v892 = vpop.xlane.xlu0 %891
    %v893 = vsub.f32 %v881, %v889
    %v894 = vsub.f32 %v884, %v892
    %v895 = vmul.f32 %v893, 1.442695
    %v896 = vpow.pop %v895
    %v897 = vmul.f32 %v894, 1.442695
    %v898 = vpow.pop %v897
    %v899 = vsel %vm235, %v896, 0.0
    %900 = vadd.xlane.f32.xlu0 %v899
    %v901 = vpop.xlane.xlu0 %900
    %v902 = vsel %vm235, %v898, 0.0
    %903 = vadd.xlane.f32.xlu0 %v902
    %v904 = vpop.xlane.xlu0 %903
    %v905 = vrcp.pop %v901
    %v906 = vrcp.pop %v904
    %v907 = vmul.f32 %v896, %v905
    %v908 = vmul.f32 %v898, %v906
    %v909 = vpack.c.bf16 %v908, %v907
    %910 = vrot.lane.b32.xlu0 %v183, 44
    %v911 = vpop.permute.xlu0 %910
    %v914 = vsel %vm235, %v909, 0
    %916 = vmatprep.subr.bf16.mxu0 0
    %917 = vmatpush1.bf16.msra.mxu0 %v911
    %918 = vmatprep.subr.bf16.mxu0 0
    %919 = vmatpush1.bf16.msra.mxu0 0
    %920 = vmatprep.subr.bf16.mxu0 0
    %921 = vmatpush1.bf16.msra.mxu0 0
    %922 = vmatprep.subr.bf16.mxu0 0
    %923 = vmatpush1.bf16.msra.mxu0 0
    %924 = vmatprep.subr.bf16.mxu0 0
    %925 = vmatpush1.bf16.msra.mxu0 0
    %926 = vmatprep.subr.bf16.mxu0 0
    %927 = vmatpush1.bf16.msra.mxu0 0
    %928 = vmatprep.subr.bf16.mxu0 0
    %929 = vmatpush1.bf16.msra.mxu0 0
    %930 = vmatprep.subr.bf16.mxu0 0
    %931 = vmatpush1.bf16.msra.mxu0 0
    %932 = vmatprep.subr.bf16.mxu0 0
    %933 = vmatpush1.bf16.msra.mxu0 0
    %934 = vmatprep.subr.bf16.mxu0 0
    %935 = vmatpush1.bf16.msra.mxu0 0
    %936 = vmatprep.subr.bf16.mxu0 0
    %937 = vmatpush1.bf16.msra.mxu0 0
    %938 = vmatprep.subr.bf16.mxu0 0
    %939 = vmatpush1.bf16.msra.mxu0 0
    %940 = vmatprep.subr.bf16.mxu0 0
    %941 = vmatpush1.bf16.msra.mxu0 0
    %942 = vmatprep.subr.bf16.mxu0 0
    %943 = vmatpush1.bf16.msra.mxu0 0
    %944 = vmatprep.subr.bf16.mxu0 0
    %945 = vmatpush1.bf16.msra.mxu0 0
    %946 = vmatprep.subr.bf16.mxu0 0
    %947 = vmatpush1.bf16.msra.mxu0 0
    %948 = vmatprep.mubr.bf16.mxu0 0
    %949 = vmatmul.mubr.bf16.gmra.mrb[0].mxu0 %v914
    %v950 = vpop.f32.mrb[0].mxu0
    %v951 = vadd.f32 0.0, %v950
    %v952 = vpop.f32.mrb[0].mxu0
    %v953 = vpop.f32.mrb[0].mxu0
    %v954 = vadd.f32 0.0, %v953
    %v955 = vpop.f32.mrb[0].mxu0
    %956 = vdwg.mxu0
    %959 = vrot.lane.b32.xlu0 %v951, 20
    %v960 = vpop.permute.xlu0 %959
    %961 = vrot.lane.b32.xlu0 %v954, 20
    %v962 = vpop.permute.xlu0 %961
    %vm965 = vcmask 195744
    %966 = vst.msk [vmem:[#allocation2] sm:$0xff] %vm965, %v960
    %967 = vst.msk [vmem:[#allocation2 + $0x8] sm:$0xff] %vm965, %v962
    %968 = vrot.lane.b32.xlu0 %v183, 104
    %v969 = vpop.permute.xlu0 %968
    %970 = vrot.lane.b32.xlu0 %v183, 72
    %v971 = vpop.permute.xlu0 %970
    %v973 = vsel %vm187, %v969, 0
    %v976 = vsel %vm187, %v971, 0
    %978 = vmatprep.subr.bf16.mxu0 0
    %979 = vmatpush1.bf16.xpose.msra.mxu0 %v976
    %980 = vmatprep.subr.bf16.mxu0 0
    %981 = vmatpush1.bf16.xpose.msra.mxu0 0
    %982 = vmatprep.subr.bf16.mxu0 0
    %983 = vmatpush1.bf16.xpose.msra.mxu0 0
    %984 = vmatprep.subr.bf16.mxu0 0
    %985 = vmatpush1.bf16.xpose.msra.mxu0 0
    %986 = vmatprep.subr.bf16.mxu0 0
    %987 = vmatpush1.bf16.xpose.msra.mxu0 0
    %988 = vmatprep.subr.bf16.mxu0 0
    %989 = vmatpush1.bf16.xpose.msra.mxu0 0
    %990 = vmatprep.subr.bf16.mxu0 0
    %991 = vmatpush1.bf16.xpose.msra.mxu0 0
    %992 = vmatprep.subr.bf16.mxu0 0
    %993 = vmatpush1.bf16.xpose.msra.mxu0 0
    %994 = vmatprep.subr.bf16.mxu0 0
    %995 = vmatpush1.bf16.xpose.msra.mxu0 0
    %996 = vmatprep.subr.bf16.mxu0 0
    %997 = vmatpush1.bf16.xpose.msra.mxu0 0
    %998 = vmatprep.subr.bf16.mxu0 0
    %999 = vmatpush1.bf16.xpose.msra.mxu0 0
    %1000 = vmatprep.subr.bf16.mxu0 0
    %1001 = vmatpush1.bf16.xpose.msra.mxu0 0
    %1002 = vmatprep.subr.bf16.mxu0 0
    %1003 = vmatpush1.bf16.xpose.msra.mxu0 0
    %1004 = vmatprep.subr.bf16.mxu0 0
    %1005 = vmatpush1.bf16.xpose.msra.mxu0 0
    %1006 = vmatprep.subr.bf16.mxu0 0
    %1007 = vmatpush1.bf16.xpose.msra.mxu0 0
    %1008 = vmatprep.subr.bf16.mxu0 0
    %1009 = vmatpush1.bf16.xpose.msra.mxu0 0
    %1010 = vmatprep.mubr.bf16.mxu0 0
    %1011 = vmatmul.mubr.bf16.gmra.mrb[0].mxu0 %v973
    %v1012 = vpop.f32.mrb[0].mxu0
    %v1013 = vadd.f32 %v67, %v1012
    %v1014 = vpop.f32.mrb[0].mxu0
    %v1015 = vpop.f32.mrb[0].mxu0
    %v1016 = vadd.f32 %v68, %v1015
    %v1017 = vpop.f32.mrb[0].mxu0
    %1018 = vdwg.mxu0
    %v1019 = vsel %vm235, %v1013, -inf
    %1020 = vmax.xlane.f32.xlu0 %v1019
    %v1021 = vpop.xlane.xlu0 %1020
    %v1022 = vsel %vm235, %v1016, -inf
    %1023 = vmax.xlane.f32.xlu0 %v1022
    %v1024 = vpop.xlane.xlu0 %1023
    %v1025 = vsub.f32 %v1013, %v1021
    %v1026 = vsub.f32 %v1016, %v1024
    %v1027 = vmul.f32 %v1025, 1.442695
    %v1028 = vpow.pop %v1027
    %v1029 = vmul.f32 %v1026, 1.442695
    %v1030 = vpow.pop %v1029
    %v1031 = vsel %vm235, %v1028, 0.0
    %1032 = vadd.xlane.f32.xlu0 %v1031
    %v1033 = vpop.xlane.xlu0 %1032
    %v1034 = vsel %vm235, %v1030, 0.0
    %1035 = vadd.xlane.f32.xlu0 %v1034
    %v1036 = vpop.xlane.xlu0 %1035
    %v1037 = vrcp.pop %v1033
    %v1038 = vrcp.pop %v1036
    %v1039 = vmul.f32 %v1028, %v1037
    %v1040 = vmul.f32 %v1030, %v1038
    %v1041 = vpack.c.bf16 %v1040, %v1039
    %1042 = vrot.lane.b32.xlu0 %v183, 40
    %v1043 = vpop.permute.xlu0 %1042
    %v1046 = vsel %vm235, %v1041, 0
    %1048 = vmatprep.subr.bf16.mxu0 0
    %1049 = vmatpush1.bf16.msra.mxu0 %v1043
    %1050 = vmatprep.subr.bf16.mxu0 0
    %1051 = vmatpush1.bf16.msra.mxu0 0
    %1052 = vmatprep.subr.bf16.mxu0 0
    %1053 = vmatpush1.bf16.msra.mxu0 0
    %1054 = vmatprep.subr.bf16.mxu0 0
    %1055 = vmatpush1.bf16.msra.mxu0 0
    %1056 = vmatprep.subr.bf16.mxu0 0
    %1057 = vmatpush1.bf16.msra.mxu0 0
    %1058 = vmatprep.subr.bf16.mxu0 0
    %1059 = vmatpush1.bf16.msra.mxu0 0
    %1060 = vmatprep.subr.bf16.mxu0 0
    %1061 = vmatpush1.bf16.msra.mxu0 0
    %1062 = vmatprep.subr.bf16.mxu0 0
    %1063 = vmatpush1.bf16.msra.mxu0 0
    %1064 = vmatprep.subr.bf16.mxu0 0
    %1065 = vmatpush1.bf16.msra.mxu0 0
    %1066 = vmatprep.subr.bf16.mxu0 0
    %1067 = vmatpush1.bf16.msra.mxu0 0
    %1068 = vmatprep.subr.bf16.mxu0 0
    %1069 = vmatpush1.bf16.msra.mxu0 0
    %1070 = vmatprep.subr.bf16.mxu0 0
    %1071 = vmatpush1.bf16.msra.mxu0 0
    %1072 = vmatprep.subr.bf16.mxu0 0
    %1073 = vmatpush1.bf16.msra.mxu0 0
    %1074 = vmatprep.subr.bf16.mxu0 0
    %1075 = vmatpush1.bf16.msra.mxu0 0
    %1076 = vmatprep.subr.bf16.mxu0 0
    %1077 = vmatpush1.bf16.msra.mxu0 0
    %1078 = vmatprep.subr.bf16.mxu0 0
    %1079 = vmatpush1.bf16.msra.mxu0 0
    %1080 = vmatprep.mubr.bf16.mxu0 0
    %1081 = vmatmul.mubr.bf16.gmra.mrb[0].mxu0 %v1046
    %v1082 = vpop.f32.mrb[0].mxu0
    %v1083 = vadd.f32 0.0, %v1082
    %v1084 = vpop.f32.mrb[0].mxu0
    %v1085 = vpop.f32.mrb[0].mxu0
    %v1086 = vadd.f32 0.0, %v1085
    %v1087 = vpop.f32.mrb[0].mxu0
    %1088 = vdwg.mxu0
    %1091 = vrot.lane.b32.xlu0 %v1083, 24
    %v1092 = vpop.permute.xlu0 %1091
    %1093 = vrot.lane.b32.xlu0 %v1086, 24
    %v1094 = vpop.permute.xlu0 %1093
    %vm1097 = vcmask 228544
    %1098 = vst.msk [vmem:[#allocation2] sm:$0xff] %vm1097, %v1092
    %1099 = vst.msk [vmem:[#allocation2 + $0x8] sm:$0xff] %vm1097, %v1094
    %1100 = vrot.lane.b32.xlu0 %v183, 100
    %v1101 = vpop.permute.xlu0 %1100
    %1102 = vrot.lane.b32.xlu0 %v183, 68
    %v1103 = vpop.permute.xlu0 %1102
    %v1105 = vsel %vm187, %v1101, 0
    %v1108 = vsel %vm187, %v1103, 0
    %1110 = vmatprep.subr.bf16.mxu0 0
    %1111 = vmatpush1.bf16.xpose.msra.mxu0 %v1108
    %1112 = vmatprep.subr.bf16.mxu0 0
    %1113 = vmatpush1.bf16.xpose.msra.mxu0 0
    %1114 = vmatprep.subr.bf16.mxu0 0
    %1115 = vmatpush1.bf16.xpose.msra.mxu0 0
    %1116 = vmatprep.subr.bf16.mxu0 0
    %1117 = vmatpush1.bf16.xpose.msra.mxu0 0
    %1118 = vmatprep.subr.bf16.mxu0 0
    %1119 = vmatpush1.bf16.xpose.msra.mxu0 0
    %1120 = vmatprep.subr.bf16.mxu0 0
    %1121 = vmatpush1.bf16.xpose.msra.mxu0 0
    %1122 = vmatprep.subr.bf16.mxu0 0
    %1123 = vmatpush1.bf16.xpose.msra.mxu0 0
    %1124 = vmatprep.subr.bf16.mxu0 0
    %1125 = vmatpush1.bf16.xpose.msra.mxu0 0
    %1126 = vmatprep.subr.bf16.mxu0 0
    %1127 = vmatpush1.bf16.xpose.msra.mxu0 0
    %1128 = vmatprep.subr.bf16.mxu0 0
    %1129 = vmatpush1.bf16.xpose.msra.mxu0 0
    %1130 = vmatprep.subr.bf16.mxu0 0
    %1131 = vmatpush1.bf16.xpose.msra.mxu0 0
    %1132 = vmatprep.subr.bf16.mxu0 0
    %1133 = vmatpush1.bf16.xpose.msra.mxu0 0
    %1134 = vmatprep.subr.bf16.mxu0 0
    %1135 = vmatpush1.bf16.xpose.msra.mxu0 0
    %1136 = vmatprep.subr.bf16.mxu0 0
    %1137 = vmatpush1.bf16.xpose.msra.mxu0 0
    %1138 = vmatprep.subr.bf16.mxu0 0
    %1139 = vmatpush1.bf16.xpose.msra.mxu0 0
    %1140 = vmatprep.subr.bf16.mxu0 0
    %1141 = vmatpush1.bf16.xpose.msra.mxu0 0
    %1142 = vmatprep.mubr.bf16.mxu0 0
    %1143 = vmatmul.mubr.bf16.gmra.mrb[0].mxu0 %v1105
    %v1144 = vpop.f32.mrb[0].mxu0
    %v1145 = vadd.f32 %v67, %v1144
    %v1146 = vpop.f32.mrb[0].mxu0
    %v1147 = vpop.f32.mrb[0].mxu0
    %v1148 = vadd.f32 %v68, %v1147
    %v1149 = vpop.f32.mrb[0].mxu0
    %1150 = vdwg.mxu0
    %v1151 = vsel %vm235, %v1145, -inf
    %1152 = vmax.xlane.f32.xlu0 %v1151
    %v1153 = vpop.xlane.xlu0 %1152
    %v1154 = vsel %vm235, %v1148, -inf
    %1155 = vmax.xlane.f32.xlu0 %v1154
    %v1156 = vpop.xlane.xlu0 %1155
    %v1157 = vsub.f32 %v1145, %v1153
    %v1158 = vsub.f32 %v1148, %v1156
    %v1159 = vmul.f32 %v1157, 1.442695
    %v1160 = vpow.pop %v1159
    %v1161 = vmul.f32 %v1158, 1.442695
    %v1162 = vpow.pop %v1161
    %v1163 = vsel %vm235, %v1160, 0.0
    %1164 = vadd.xlane.f32.xlu0 %v1163
    %v1165 = vpop.xlane.xlu0 %1164
    %v1166 = vsel %vm235, %v1162, 0.0
    %1167 = vadd.xlane.f32.xlu0 %v1166
    %v1168 = vpop.xlane.xlu0 %1167
    %v1169 = vrcp.pop %v1165
    %v1170 = vrcp.pop %v1168
    %v1171 = vmul.f32 %v1160, %v1169
    %v1172 = vmul.f32 %v1162, %v1170
    %v1173 = vpack.c.bf16 %v1172, %v1171
    %1174 = vrot.lane.b32.xlu0 %v183, 36
    %v1175 = vpop.permute.xlu0 %1174
    %v1178 = vsel %vm235, %v1173, 0
    %1180 = vmatprep.subr.bf16.mxu0 0
    %1181 = vmatpush1.bf16.msra.mxu0 %v1175
    %1182 = vmatprep.subr.bf16.mxu0 0
    %1183 = vmatpush1.bf16.msra.mxu0 0
    %1184 = vmatprep.subr.bf16.mxu0 0
    %1185 = vmatpush1.bf16.msra.mxu0 0
    %1186 = vmatprep.subr.bf16.mxu0 0
    %1187 = vmatpush1.bf16.msra.mxu0 0
    %1188 = vmatprep.subr.bf16.mxu0 0
    %1189 = vmatpush1.bf16.msra.mxu0 0
    %1190 = vmatprep.subr.bf16.mxu0 0
    %1191 = vmatpush1.bf16.msra.mxu0 0
    %1192 = vmatprep.subr.bf16.mxu0 0
    %1193 = vmatpush1.bf16.msra.mxu0 0
    %1194 = vmatprep.subr.bf16.mxu0 0
    %1195 = vmatpush1.bf16.msra.mxu0 0
    %1196 = vmatprep.subr.bf16.mxu0 0
    %1197 = vmatpush1.bf16.msra.mxu0 0
    %1198 = vmatprep.subr.bf16.mxu0 0
    %1199 = vmatpush1.bf16.msra.mxu0 0
    %1200 = vmatprep.subr.bf16.mxu0 0
    %1201 = vmatpush1.bf16.msra.mxu0 0
    %1202 = vmatprep.subr.bf16.mxu0 0
    %1203 = vmatpush1.bf16.msra.mxu0 0
    %1204 = vmatprep.subr.bf16.mxu0 0
    %1205 = vmatpush1.bf16.msra.mxu0 0
    %1206 = vmatprep.subr.bf16.mxu0 0
    %1207 = vmatpush1.bf16.msra.mxu0 0
    %1208 = vmatprep.subr.bf16.mxu0 0
    %1209 = vmatpush1.bf16.msra.mxu0 0
    %1210 = vmatprep.subr.bf16.mxu0 0
    %1211 = vmatpush1.bf16.msra.mxu0 0
    %1212 = vmatprep.mubr.bf16.mxu0 0
    %1213 = vmatmul.mubr.bf16.gmra.mrb[0].mxu0 %v1178
    %v1214 = vpop.f32.mrb[0].mxu0
    %v1215 = vadd.f32 0.0, %v1214
    %v1216 = vpop.f32.mrb[0].mxu0
    %v1217 = vpop.f32.mrb[0].mxu0
    %v1218 = vadd.f32 0.0, %v1217
    %v1219 = vpop.f32.mrb[0].mxu0
    %1220 = vdwg.mxu0
    %1223 = vrot.lane.b32.xlu0 %v1215, 28
    %v1224 = vpop.permute.xlu0 %1223
    %1225 = vrot.lane.b32.xlu0 %v1218, 28
    %v1226 = vpop.permute.xlu0 %1225
    %vm1229 = vcmask 261344
    %1230 = vst.msk [vmem:[#allocation2] sm:$0xff] %vm1229, %v1224
    %1231 = vst.msk [vmem:[#allocation2 + $0x8] sm:$0xff] %vm1229, %v1226
    %v1232 = vld [vmem:[#allocation2] sm:$0xff]
    %v1233 = vld [vmem:[#allocation2 + $0x8] sm:$0xff]
    %v1234 = vpack.c.bf16 %v1233, %v1232
    %v1235 = vld [vmem:[%s3] sm:$0xf]
    %v1236 = vld [vmem:[%s3 + $0x4] sm:$0xf]
    %v1237 = vld [vmem:[%s3 + $0x8] sm:$0xf]
    %v1238 = vld [vmem:[%s3 + $0xc] sm:$0xf]
    %v1239 = vld [vmem:[%s4] sm:$0x1]
    %v1241 = vlaneseq
    %v1242 = vshrl.u32 %v1241, 7
    %v1243 = vsub.s32 0, %v1242
    %v1244 = vrot.slane %v1239, %v1243
    %v1250 = vunpack.c.l.b16 %v1235
    %v1251 = vunpack.c.l.b16 %v1236
    %v1252 = vunpack.c.l.b16 %v1237
    %v1253 = vunpack.c.l.b16 %v1238
    %v1254 = vpack.c.b16 %v1251, %v1250
    %v1255 = vpack.c.b16 %v1253, %v1252
    %v1259 = vsel %vm71, %v1234, 0
    %1261 = vmatprep.subr.bf16.mxu0 0
    %1262 = vmatpush1.bf16.msra.mxu0 %v1254
    %1263 = vmatprep.subr.bf16.mxu0 0
    %1264 = vmatpush1.bf16.msra.mxu0 %v1255
    %1265 = vmatprep.subr.bf16.mxu0 0
    %1266 = vmatpush1.bf16.msra.mxu0 0
    %1267 = vmatprep.subr.bf16.mxu0 0
    %1268 = vmatpush1.bf16.msra.mxu0 0
    %1269 = vmatprep.subr.bf16.mxu0 0
    %1270 = vmatpush1.bf16.msra.mxu0 0
    %1271 = vmatprep.subr.bf16.mxu0 0
    %1272 = vmatpush1.bf16.msra.mxu0 0
    %1273 = vmatprep.subr.bf16.mxu0 0
    %1274 = vmatpush1.bf16.msra.mxu0 0
    %1275 = vmatprep.subr.bf16.mxu0 0
    %1276 = vmatpush1.bf16.msra.mxu0 0
    %1277 = vmatprep.subr.bf16.mxu0 0
    %1278 = vmatpush1.bf16.msra.mxu0 0
    %1279 = vmatprep.subr.bf16.mxu0 0
    %1280 = vmatpush1.bf16.msra.mxu0 0
    %1281 = vmatprep.subr.bf16.mxu0 0
    %1282 = vmatpush1.bf16.msra.mxu0 0
    %1283 = vmatprep.subr.bf16.mxu0 0
    %1284 = vmatpush1.bf16.msra.mxu0 0
    %1285 = vmatprep.subr.bf16.mxu0 0
    %1286 = vmatpush1.bf16.msra.mxu0 0
    %1287 = vmatprep.subr.bf16.mxu0 0
    %1288 = vmatpush1.bf16.msra.mxu0 0
    %1289 = vmatprep.subr.bf16.mxu0 0
    %1290 = vmatpush1.bf16.msra.mxu0 0
    %1291 = vmatprep.subr.bf16.mxu0 0
    %1292 = vmatpush1.bf16.msra.mxu0 0
    %1293 = vmatprep.mubr.bf16.mxu0 0
    %1294 = vmatmul.mubr.bf16.gmra.mrb[0].mxu0 %v1259
    %v1295 = vpop.f32.mrb[0].mxu0
    %v1296 = vadd.f32 %v1244, %v1295
    %v1297 = vpop.f32.mrb[0].mxu0
    %v1298 = vpop.f32.mrb[0].mxu0
    %v1299 = vadd.f32 %v1244, %v1298
    %v1300 = vpop.f32.mrb[0].mxu0
    %1301 = vdwg.mxu0
    %v1302 = vadd.f32 %v46, %v1296
    %v1303 = vadd.f32 %v47, %v1299
    %v1304 = vld [vmem:[%s11] sm:$0x1]
    %v1305 = vld [vmem:[%s12] sm:$0x1]
    %v1306 = vsel %vm71, %v1302, 0.0
    %1307 = vadd.xlane.f32.xlu0 %v1306
    %v1308 = vpop.xlane.xlu0 %1307
    %v1309 = vsel %vm71, %v1303, 0.0
    %1310 = vadd.xlane.f32.xlu0 %v1309
    %v1311 = vpop.xlane.xlu0 %1310
    %v1312 = vmul.f32 %v1308, %v78
    %v1313 = vmul.f32 %v1311, %v78
    %v1314 = vsub.f32 %v1302, %v1312
    %v1315 = vsub.f32 %v1303, %v1313
    %v1316 = vmul.f32 %v1314, %v1314
    %v1317 = vmul.f32 %v1315, %v1315
    %v1318 = vsel %vm71, %v1316, 0.0
    %1319 = vadd.xlane.f32.xlu0 %v1318
    %v1320 = vpop.xlane.xlu0 %1319
    %v1321 = vsel %vm71, %v1317, 0.0
    %1322 = vadd.xlane.f32.xlu0 %v1321
    %v1323 = vpop.xlane.xlu0 %1322
    %v1324 = vmul.f32 %v1320, %v78
    %v1325 = vmul.f32 %v1323, %v78
    %v1326 = vadd.f32 %v1324, 1e-05
    %v1327 = vadd.f32 %v1325, 1e-05
    %v1328 = vrsqrt.pop %v1326
    %v1329 = vrsqrt.pop %v1327
    %v1330 = vmul.f32 %v1314, %v1328
    %v1331 = vmul.f32 %v1315, %v1329
    %v1333 = vlaneseq
    %v1334 = vshrl.u32 %v1333, 7
    %v1335 = vsub.s32 0, %v1334
    %v1336 = vrot.slane %v1304, %v1335
    %v1338 = vmul.f32 %v1330, %v1336
    %v1339 = vmul.f32 %v1331, %v1336
    %v1341 = vlaneseq
    %v1342 = vshrl.u32 %v1341, 7
    %v1343 = vsub.s32 0, %v1342
    %v1344 = vrot.slane %v1305, %v1343
    %v1346 = vadd.f32 %v1338, %v1344
    %v1347 = vadd.f32 %v1339, %v1344
    %v1348 = vpack.c.bf16 %v1347, %v1346
    %v1349 = vld [vmem:[%s5] sm:$0xf]
    %v1350 = vld [vmem:[%s5 + $0x4] sm:$0xf]
    %v1351 = vld [vmem:[%s5 + $0x8] sm:$0xf]
    %v1352 = vld [vmem:[%s5 + $0xc] sm:$0xf]
    %v1353 = vld [vmem:[%s6] sm:$0x1]
    %v1355 = vlaneseq
    %v1356 = vshrl.u32 %v1355, 7
    %v1357 = vsub.s32 0, %v1356
    %v1358 = vrot.slane %v1353, %v1357
    %v1364 = vunpack.c.l.b16 %v1349
    %v1365 = vunpack.c.l.b16 %v1350
    %v1366 = vunpack.c.l.b16 %v1351
    %v1367 = vunpack.c.l.b16 %v1352
    %v1368 = vpack.c.b16 %v1365, %v1364
    %v1369 = vpack.c.b16 %v1367, %v1366
    %v1373 = vsel %vm71, %v1348, 0
    %1375 = vmatprep.subr.bf16.mxu0 0
    %1376 = vmatpush1.bf16.msra.mxu0 %v1368
    %1377 = vmatprep.subr.bf16.mxu0 0
    %1378 = vmatpush1.bf16.msra.mxu0 %v1369
    %1379 = vmatprep.subr.bf16.mxu0 0
    %1380 = vmatpush1.bf16.msra.mxu0 0
    %1381 = vmatprep.subr.bf16.mxu0 0
    %1382 = vmatpush1.bf16.msra.mxu0 0
    %1383 = vmatprep.subr.bf16.mxu0 0
    %1384 = vmatpush1.bf16.msra.mxu0 0
    %1385 = vmatprep.subr.bf16.mxu0 0
    %1386 = vmatpush1.bf16.msra.mxu0 0
    %1387 = vmatprep.subr.bf16.mxu0 0
    %1388 = vmatpush1.bf16.msra.mxu0 0
    %1389 = vmatprep.subr.bf16.mxu0 0
    %1390 = vmatpush1.bf16.msra.mxu0 0
    %1391 = vmatprep.subr.bf16.mxu0 0
    %1392 = vmatpush1.bf16.msra.mxu0 0
    %1393 = vmatprep.subr.bf16.mxu0 0
    %1394 = vmatpush1.bf16.msra.mxu0 0
    %1395 = vmatprep.subr.bf16.mxu0 0
    %1396 = vmatpush1.bf16.msra.mxu0 0
    %1397 = vmatprep.subr.bf16.mxu0 0
    %1398 = vmatpush1.bf16.msra.mxu0 0
    %1399 = vmatprep.subr.bf16.mxu0 0
    %1400 = vmatpush1.bf16.msra.mxu0 0
    %1401 = vmatprep.subr.bf16.mxu0 0
    %1402 = vmatpush1.bf16.msra.mxu0 0
    %1403 = vmatprep.subr.bf16.mxu0 0
    %1404 = vmatpush1.bf16.msra.mxu0 0
    %1405 = vmatprep.subr.bf16.mxu0 0
    %1406 = vmatpush1.bf16.msra.mxu0 0
    %1407 = vmatprep.mubr.bf16.mxu0 0
    %1408 = vmatmul.mubr.bf16.gmra.mrb[0].mxu0 %v1373
    %v1409 = vpop.f32.mrb[0].mxu0
    %v1410 = vadd.f32 %v1358, %v1409
    %v1411 = vpop.f32.mrb[0].mxu0
    %v1412 = vpop.f32.mrb[0].mxu0
    %v1413 = vadd.f32 %v1358, %v1412
    %v1414 = vpop.f32.mrb[0].mxu0
    %1415 = vdwg.mxu0
    %v1416 = vmax.f32 %v1410, 0.0
    %v1417 = vmax.f32 %v1413, 0.0
    %v1418 = vpack.c.bf16 %v1417, %v1416
    %v1419 = vld [vmem:[%s7] sm:$0xf]
    %v1420 = vld [vmem:[%s7 + $0x4] sm:$0xf]
    %v1421 = vld [vmem:[%s7 + $0x8] sm:$0xf]
    %v1422 = vld [vmem:[%s7 + $0xc] sm:$0xf]
    %v1423 = vld [vmem:[%s7 + $0x10] sm:$0xf]
    %v1424 = vld [vmem:[%s7 + $0x14] sm:$0xf]
    %v1425 = vld [vmem:[%s7 + $0x18] sm:$0xf]
    %v1426 = vld [vmem:[%s7 + $0x1c] sm:$0xf]
    %v1427 = vld [vmem:[%s7 + $0x20] sm:$0xf]
    %v1428 = vld [vmem:[%s7 + $0x24] sm:$0xf]
    %v1429 = vld [vmem:[%s7 + $0x28] sm:$0xf]
    %v1430 = vld [vmem:[%s7 + $0x2c] sm:$0xf]
    %v1431 = vld [vmem:[%s7 + $0x30] sm:$0xf]
    %v1432 = vld [vmem:[%s7 + $0x34] sm:$0xf]
    %v1433 = vld [vmem:[%s7 + $0x38] sm:$0xf]
    %v1434 = vld [vmem:[%s7 + $0x3c] sm:$0xf]
    %v1435 = vld [vmem:[%s8] sm:$0x1]
    %v1437 = vlaneseq
    %v1438 = vshrl.u32 %v1437, 7
    %v1439 = vsub.s32 0, %v1438
    %v1440 = vrot.slane %v1435, %v1439
    %v1458 = vunpack.c.l.b16 %v1419
    %v1459 = vunpack.c.l.b16 %v1420
    %v1460 = vunpack.c.l.b16 %v1421
    %v1461 = vunpack.c.l.b16 %v1422
    %v1462 = vunpack.c.l.b16 %v1423
    %v1463 = vunpack.c.l.b16 %v1424
    %v1464 = vunpack.c.l.b16 %v1425
    %v1465 = vunpack.c.l.b16 %v1426
    %v1466 = vunpack.c.l.b16 %v1427
    %v1467 = vunpack.c.l.b16 %v1428
    %v1468 = vunpack.c.l.b16 %v1429
    %v1469 = vunpack.c.l.b16 %v1430
    %v1470 = vunpack.c.l.b16 %v1431
    %v1471 = vunpack.c.l.b16 %v1432
    %v1472 = vunpack.c.l.b16 %v1433
    %v1473 = vunpack.c.l.b16 %v1434
    %v1474 = vpack.c.b16 %v1459, %v1458
    %v1475 = vpack.c.b16 %v1461, %v1460
    %v1476 = vpack.c.b16 %v1463, %v1462
    %v1477 = vpack.c.b16 %v1465, %v1464
    %v1478 = vpack.c.b16 %v1467, %v1466
    %v1479 = vpack.c.b16 %v1469, %v1468
    %v1480 = vpack.c.b16 %v1471, %v1470
    %v1481 = vpack.c.b16 %v1473, %v1472
    %1490 = vmatprep.subr.bf16.mxu0 0
    %1491 = vmatpush1.bf16.msra.mxu0 %v1474
    %1492 = vmatprep.subr.bf16.mxu0 0
    %1493 = vmatpush1.bf16.msra.mxu0 %v1475
    %1494 = vmatprep.subr.bf16.mxu0 0
    %1495 = vmatpush1.bf16.msra.mxu0 %v1476
    %1496 = vmatprep.subr.bf16.mxu0 0
    %1497 = vmatpush1.bf16.msra.mxu0 %v1477
    %1498 = vmatprep.subr.bf16.mxu0 0
    %1499 = vmatpush1.bf16.msra.mxu0 %v1478
    %1500 = vmatprep.subr.bf16.mxu0 0
    %1501 = vmatpush1.bf16.msra.mxu0 %v1479
    %1502 = vmatprep.subr.bf16.mxu0 0
    %1503 = vmatpush1.bf16.msra.mxu0 %v1480
    %1504 = vmatprep.subr.bf16.mxu0 0
    %1505 = vmatpush1.bf16.msra.mxu0 %v1481
    %1506 = vmatprep.subr.bf16.mxu0 0
    %1507 = vmatpush1.bf16.msra.mxu0 0
    %1508 = vmatprep.subr.bf16.mxu0 0
    %1509 = vmatpush1.bf16.msra.mxu0 0
    %1510 = vmatprep.subr.bf16.mxu0 0
    %1511 = vmatpush1.bf16.msra.mxu0 0
    %1512 = vmatprep.subr.bf16.mxu0 0
    %1513 = vmatpush1.bf16.msra.mxu0 0
    %1514 = vmatprep.subr.bf16.mxu0 0
    %1515 = vmatpush1.bf16.msra.mxu0 0
    %1516 = vmatprep.subr.bf16.mxu0 0
    %1517 = vmatpush1.bf16.msra.mxu0 0
    %1518 = vmatprep.subr.bf16.mxu0 0
    %1519 = vmatpush1.bf16.msra.mxu0 0
    %1520 = vmatprep.subr.bf16.mxu0 0
    %1521 = vmatpush1.bf16.msra.mxu0 0
    %1522 = vmatprep.mubr.bf16.mxu0 0
    %1523 = vmatmul.mubr.bf16.gmra.mrb[0].mxu0 %v1418
    %v1524 = vpop.f32.mrb[0].mxu0
    %v1525 = vadd.f32 %v1440, %v1524
    %v1526 = vpop.f32.mrb[0].mxu0
    %v1527 = vpop.f32.mrb[0].mxu0
    %v1528 = vadd.f32 %v1440, %v1527
    %v1529 = vpop.f32.mrb[0].mxu0
    %1530 = vdwg.mxu0
    %v1531 = vadd.f32 %v1302, %v1525
    %v1532 = vadd.f32 %v1303, %v1528
    %1533 = vst.msk [vmem:[#allocation3] sm:$0xff] %vm71, %v1531
    %1534 = vst.msk [vmem:[#allocation3 + $0x8] sm:$0xff] %vm71, %v1532
    // Predicated region
    $region54: #{tpu_custom_call.1} parent=1 // pred_check
      _
    $region55: #{tpu_custom_call.1} parent=1 // pred_check_branch
      %1536 = sbr.rel (0) target = $region57
    $region56: #{tpu_custom_call.1} parent=1 // pred_region
      %s1538 = ssub.s32 256, 256
      %1539 = vsyncadd [#allocation4], %s1538
      %s1540 = sshll.u32 [#allocation3], 4
      %s1541 = int_to_ptr.vmem [resolvable:$true] %s1540
      %1546 = dma.vmem_to_hbm [thread:$0]  %s1541, 256, %s13, [#allocation4], 128, 128, 8
    $region57: #{tpu_custom_call.1} parent=1 // pred_fallthru
      _
    // Predicated region
    $region58: #{tpu_custom_call.1} parent=1 // pred_check
      _
    $region59: #{tpu_custom_call.1} parent=1 // pred_check_branch
      %1548 = sbr.rel (0) target = $region61
    $region60: #{tpu_custom_call.1} parent=1 // pred_region
      %1549 = dma.done [#allocation4], 256
    $region61: #{tpu_custom_call.1} parent=1 // pred_fallthru
      _
    %1550 = vsyncpa [#allocation4], 1

</llo_original>
